<compile_context>
chip_gen: v5e
topology: v5e:2x2
jax: 0.10.0
libtpu: 0.0.40
codegen_flags: <defaults>
</compile_context>

<pallas_src>
import functools

import jax
import jax.numpy as jnp
from jax import lax
from jax.experimental import pallas as pl
from jax.experimental.pallas import tpu as pltpu


# --------------------------------------------------------------------------
# Generation-aware scoped-VMEM limit
# --------------------------------------------------------------------------
@functools.lru_cache(maxsize=None)
def _vmem_limit_bytes():
    """~75% of physical VMEM, capped at 100 MiB (=> ~96 MiB v5e/v6e, ~48 MiB v7x)."""
    try:
        cap = pltpu.get_tpu_info().vmem_capacity_bytes
    except Exception:
        cap = 32 * 1024 * 1024 * 4 // 3  # conservative fallback (-> 32 MiB limit)
    return int(min(cap * 3 // 4, 100 * 1024 * 1024))


# --------------------------------------------------------------------------
# One-time weight packing (hoisted out of the per-call forward)
# --------------------------------------------------------------------------
def prepack_params(raw):
    H = raw["W_hh_f"].shape[0]
    d1 = raw["U_head"].shape[-1]
    Dp = ((d1 + 127) // 128) * 128

    # BiLSTM: fuse both directions into single operands.
    #   wih : (Din, 8H) = [W_ih_f | W_ih_b]       (one hoisted input projection)
    #   whh : (2H, 8H)  block-diagonal            (one per-step hidden matmul)
    #   b   : (1, 8H)   = [b_f | b_b]             (b_ih + b_hh already folded)
    wih = jnp.concatenate([raw["W_ih_f"], raw["W_ih_b"]], axis=1)
    whh = jnp.zeros((2 * H, 8 * H), jnp.float32)
    whh = whh.at[:H, :4 * H].set(raw["W_hh_f"])
    whh = whh.at[H:, 4 * H:].set(raw["W_hh_b"])
    b = jnp.concatenate([raw["b_f"], raw["b_b"]], axis=1)

    # Biaffine: pack all C = 1 + num_labels matrices into one (Dp, C*Dp) operand,
    # u[d, c*Dp + e] = U[c, d, e], zero-padded to the 128-lane-aligned feature dim.
    U = jnp.concatenate([raw["U_head"], raw["U_label"]], axis=0)           # (C, d1, d1)
    C = U.shape[0]
    U = jnp.pad(U, ((0, 0), (0, Dp - d1), (0, Dp - d1)))                   # (C, Dp, Dp)
    u_packed = jnp.transpose(U, (1, 0, 2)).reshape(Dp, C * Dp)             # (Dp, C*Dp)

    return {"word_emb": raw["word_emb"], "pos_emb": raw["pos_emb"],
            "wih": wih, "whh": whh, "b_lstm": b, "u_packed": u_packed}


# --------------------------------------------------------------------------
# Fused-direction BiLSTM encoder kernel (single program)
# --------------------------------------------------------------------------
def bilstm_kernel(x_ref, wih_ref, whh_ref, b_ref, out_ref):
    """
    x_ref   : (L*B, Din)   time-major input (row t*B + b)
    wih_ref : (Din, 8H)    [4H fwd | 4H bwd] input->gate weights (i,f,g,o order)
    whh_ref : (2H, 8H)     block-diagonal hidden->gate weights
    b_ref   : (1, 8H)      folded biases [fwd | bwd]
    out_ref : (B, L*2H)    lane-dense output, out[b, t*2H + :] = [h_fwd(t)|h_bwd(t)]
    """
    x = x_ref[...]
    wih = wih_ref[...]
    whh = whh_ref[...]
    b = b_ref[...]
    H = whh_ref.shape[0] // 2
    B = out_ref.shape[0]
    L = out_ref.shape[1] // (2 * H)

    # Hoisted input projection for BOTH directions: ONE (L*B, Din)@(Din, 8H) matmul.
    xg = jnp.dot(x, wih, preferred_element_type=jnp.float32) + b          # (L*B, 8H)

    def cell(gates, c_prev):
        i = jax.nn.sigmoid(gates[:, 0:H])
        f = jax.nn.sigmoid(gates[:, H:2 * H])
        g = jnp.tanh(gates[:, 2 * H:3 * H])
        o = jax.nn.sigmoid(gates[:, 3 * H:4 * H])
        c_new = f * c_prev + i * g
        return o * jnp.tanh(c_new), c_new

    h = jnp.zeros((B, 2 * H), jnp.float32)          # [h_fwd | h_bwd]
    c_f = jnp.zeros((B, H), jnp.float32)
    c_b = jnp.zeros((B, H), jnp.float32)
    hf_seq = [None] * L
    hb_seq = [None] * L

    # Statically unrolled recurrence (L is toy-small here).
    # TODO(synk): for large L switch to lax.fori_loop(..., unroll=k) writing
    # per-step into a VMEM scratch to bound vreg live ranges and code size.
    for s in range(L):
        tb = L - 1 - s                               # backward-direction time index
        # ONE block-diagonal hidden matmul covers both directions' gates.
        hg = jnp.dot(h, whh, preferred_element_type=jnp.float32)          # (B, 8H)
        g_f = xg[s * B:(s + 1) * B, 0:4 * H] + hg[:, 0:4 * H]
        g_b = xg[tb * B:(tb + 1) * B, 4 * H:8 * H] + hg[:, 4 * H:8 * H]
        h_f, c_f = cell(g_f, c_f)
        h_b, c_b = cell(g_b, c_b)
        h = jnp.concatenate([h_f, h_b], axis=-1)
        hf_seq[s] = h_f                              # forward hidden for time s
        hb_seq[tb] = h_b                             # backward hidden, un-reversed

    # ONE lane-dense store of the whole encoder output (L*2H = 512 lanes here).
    pieces = []
    for t in range(L):
        pieces.append(hf_seq[t])
        pieces.append(hb_seq[t])
    out_ref[...] = jnp.concatenate(pieces, axis=-1)                        # (B, L*2H)


def bilstm_encode(x_tm, pp, *, B, L):
    """x_tm: (L*B, Din) time-major flattened input.  Returns enc (B, L, 2H)."""
    Din = x_tm.shape[1]
    H = pp["whh"].shape[0] // 2

    out = pl.pallas_call(
        bilstm_kernel,
        out_shape=jax.ShapeDtypeStruct((B, L * 2 * H), jnp.float32),
        grid=(1,),
        in_specs=[pl.BlockSpec((L * B, Din), lambda i: (0, 0)),
                  pl.BlockSpec((Din, 8 * H), lambda i: (0, 0)),
                  pl.BlockSpec((2 * H, 8 * H), lambda i: (0, 0)),
                  pl.BlockSpec((1, 8 * H), lambda i: (0, 0))],
        out_specs=pl.BlockSpec((B, L * 2 * H), lambda i: (0, 0)),
        compiler_params=pltpu.CompilerParams(
            dimension_semantics=("arbitrary",),
            vmem_limit_bytes=_vmem_limit_bytes()),
    )(x_tm, pp["wih"], pp["whh"], pp["b_lstm"])

    return out.reshape(B, L, 2 * H)


# --------------------------------------------------------------------------
# Fused head+label biaffine attention kernel (whole batch per program)
# --------------------------------------------------------------------------
def biaffine_kernel(h_ref, u_ref, out_ref):
    """
    h_ref   : (Bt, L, Dp)     bias-augmented, zero-padded encoder states
    u_ref   : (Dp, C*Dp)      packed biaffine matrices, u[d, c*Dp + e] = U[c, d, e]
    out_ref : (Bt, C, L, Lp)  scores[b, c, i, j] = h_i^T U_c h_j  (j >= L is padding)
    """
    h = h_ref[...]
    u = u_ref[...]
    Bt, L, Dp = h.shape
    C = u.shape[1] // Dp
    Lp = out_ref.shape[3]

    # Matmul 1: ONE wide lane-dense matmul feeding all C channels.
    h2 = h.reshape(Bt * L, Dp)                                             # free merge
    tmp = jnp.dot(h2, u, preferred_element_type=jnp.float32)               # (Bt*L, C*Dp)

    # Regroup channels onto the sublane axis (static 128-aligned lane slices) so
    # matmul 2 is ONE batched contraction instead of C tiny per-channel matmuls.
    tmp3 = jnp.concatenate(
        [tmp[:, c * Dp:(c + 1) * Dp].reshape(Bt, L, Dp) for c in range(C)],
        axis=1)                                                            # (Bt, C*L, Dp)

    # Zero-pad the dependent-token axis to Lp (multiple of 128) so the score tiles
    # come out lane-dense (unmasked stores); zero rows contribute exact zeros.
    hj = jnp.concatenate([h, jnp.zeros((Bt, Lp - L, Dp), jnp.float32)], axis=1)

    scores = lax.dot_general(
        tmp3, hj, dimension_numbers=(((2,), (2,)), ((0,), (0,))),
        preferred_element_type=jnp.float32)                                # (Bt, C*L, Lp)

    out_ref[...] = scores.reshape(Bt, C, L, Lp)                            # free split


def biaffine_all(enc, u_packed, *, bt=None):
    """Fused biaffine over C = 1 + num_labels channels.  Returns (B, C, L, L)."""
    B, L, D2 = enc.shape
    Dp = u_packed.shape[0]
    C = u_packed.shape[1] // Dp
    d1 = D2 + 1                                   # +1 bias feature (Dozat & Manning)
    Lp = ((L + 127) // 128) * 128                 # lane-aligned score width
    bt = B if bt is None else bt                  # Bt > 1 rows per program

    # Bias feature + zero padding to Dp (zero features hit zero rows of U -> exact).
    h = jnp.concatenate(
        [enc, jnp.ones((B, L, 1), enc.dtype),
         jnp.zeros((B, L, Dp - d1), enc.dtype)], axis=-1)                  # (B, L, Dp)

    # TODO(synk): at production sizes (large C*Dp*Dp or large B) add a C-tile grid
    # axis ("arbitrary") slicing the packed u operand and tune Bt so resident
    # operands + double-buffered blocks stay under ~48 MiB on v7x (64 MiB VMEM).
    out = pl.pallas_call(
        biaffine_kernel,
        out_shape=jax.ShapeDtypeStruct((B, C, L, Lp), jnp.float32),
        grid=(B // bt,),
        in_specs=[pl.BlockSpec((bt, L, Dp), lambda i: (i, 0, 0)),
                  pl.BlockSpec((Dp, C * Dp), lambda i: (0, 0))],
        out_specs=pl.BlockSpec((bt, C, L, Lp), lambda i: (i, 0, 0, 0)),
        compiler_params=pltpu.CompilerParams(
            dimension_semantics=("parallel",),
            vmem_limit_bytes=_vmem_limit_bytes()),
    )(h, u_packed)

    return out[..., :L]                                                    # (B, C, L, L)


# --------------------------------------------------------------------------
# Full forward pass (takes pre-packed params)
# --------------------------------------------------------------------------
def dependency_parser_forward(pp, word_idx, pos_idx):
    B, L = word_idx.shape
    # Embedding lookup is memory-bound gather glue (plain JAX); gather directly in
    # time-major order so the LSTM kernel needs no in-kernel reshape/relayout.
    word_vec = jnp.take(pp["word_emb"], word_idx.T, axis=0)               # (L, B, Ew)
    pos_vec = jnp.take(pp["pos_emb"], pos_idx.T, axis=0)                  # (L, B, Ep)
    x_tm = jnp.concatenate([word_vec, pos_vec], axis=-1)                  # (L, B, Din)
    x_tm = x_tm.reshape(L * B, x_tm.shape[-1])                            # (L*B, Din)

    enc = bilstm_encode(x_tm, pp, B=B, L=L)                               # (B, L, 2H)

    scores = biaffine_all(enc, pp["u_packed"])                            # (B, C, L, L)
    head_scores = scores[:, 0]                                            # (B, L, L)
    label_scores = scores[:, 1:]                                          # (B, nl, L, L)
    return head_scores, label_scores


# --------------------------------------------------------------------------
# Pure-JAX reference (uses the RAW, un-packed params)
# --------------------------------------------------------------------------
def _lstm_ref(x, wi, wh, b, reverse):
    B, _, _ = x.shape
    H = wh.shape[0]
    xs = jnp.transpose(x, (1, 0, 2))
    if reverse:
        xs = xs[::-1]

    def step(carry, xt):
        h, c = carry
        g = xt @ wi + h @ wh + b
        i = jax.nn.sigmoid(g[:, :H])
        f = jax.nn.sigmoid(g[:, H:2 * H])
        gg = jnp.tanh(g[:, 2 * H:3 * H])
        o = jax.nn.sigmoid(g[:, 3 * H:])
        c = f * c + i * gg
        h = o * jnp.tanh(c)
        return (h, c), h

    _, hs = jax.lax.scan(step,
                         (jnp.zeros((B, H), jnp.float32),
                          jnp.zeros((B, H), jnp.float32)), xs)
    if reverse:
        hs = hs[::-1]
    return jnp.transpose(hs, (1, 0, 2))


def reference_forward(raw, word_idx, pos_idx):
    wv = raw["word_emb"][word_idx]
    pv = raw["pos_emb"][pos_idx]
    x = jnp.concatenate([wv, pv], -1)
    hf = _lstm_ref(x, raw["W_ih_f"], raw["W_hh_f"], raw["b_f"], False)
    hb = _lstm_ref(x, raw["W_ih_b"], raw["W_hh_b"], raw["b_b"], True)
    enc = jnp.concatenate([hf, hb], -1)
    B, L, _ = enc.shape
    ea = jnp.concatenate([enc, jnp.ones((B, L, 1), enc.dtype)], -1)

    def bi(U):
        return jnp.einsum("bid,cde,bje->bcij", ea, U, ea)

    return bi(raw["U_head"])[:, 0], bi(raw["U_label"])


# --------------------------------------------------------------------------
if __name__ == "__main__":
    # Module hyper-params (small, consistent with the __init__ signature)
    V_word, V_pos = 100, 20
    E_word, E_pos = 16, 16
    H = 32                    # lstm_dim -> encoder output dim 2H = 64
    num_labels = 5
    B, L = 2, 8
    Din = E_word + E_pos
    d1 = 2 * H + 1            # biaffine bias-augmented feature dim

    key = jax.random.PRNGKey(0)
    ks = jax.random.split(key, 12)
    s = 0.1
    raw = dict(
        word_emb=jax.random.normal(ks[0], (V_word, E_word), jnp.float32) * s,
        pos_emb=jax.random.normal(ks[1], (V_pos, E_pos), jnp.float32) * s,
        W_ih_f=jax.random.normal(ks[2], (Din, 4 * H), jnp.float32) * s,
        W_hh_f=jax.random.normal(ks[3], (H, 4 * H), jnp.float32) * s,
        b_f=jax.random.normal(ks[4], (1, 4 * H), jnp.float32) * s,
        W_ih_b=jax.random.normal(ks[5], (Din, 4 * H), jnp.float32) * s,
        W_hh_b=jax.random.normal(ks[6], (H, 4 * H), jnp.float32) * s,
        b_b=jax.random.normal(ks[7], (1, 4 * H), jnp.float32) * s,
        U_head=jax.random.normal(ks[8], (1, d1, d1), jnp.float32) * s,
        U_label=jax.random.normal(ks[9], (num_labels, d1, d1), jnp.float32) * s,
    )
    word_idx = jax.random.randint(ks[10], (B, L), 0, V_word)
    pos_idx = jax.random.randint(ks[11], (B, L), 0, V_pos)

    # One-time weight packing (hoisted out of the forward path).
    pp = prepack_params(raw)
    pp = jax.tree_util.tree_map(jax.block_until_ready, pp)

    fwd = jax.jit(dependency_parser_forward)
    head_scores, label_scores = fwd(pp, word_idx, pos_idx)
    jax.block_until_ready((head_scores, label_scores))

    assert head_scores.shape == (B, L, L)
    assert label_scores.shape == (B, num_labels, L, L)

    ref_head, ref_label = reference_forward(raw, word_idx, pos_idx)
    assert jnp.allclose(head_scores, ref_head, atol=1e-4, rtol=1e-4)
    assert jnp.allclose(label_scores, ref_label, atol=1e-4, rtol=1e-4)

    print("KERNEL_OK")
</pallas_src>

<mosaic_0001>
module attributes {stable_mosaic.version = 11 : i64} {
  func.func @biaffine_kernel(%arg0: i32, %arg1: memref<2x8x128xf32, #tpu.memory_space<vmem>>, %arg2: memref<128x768xf32, #tpu.memory_space<vmem>>, %arg3: memref<2x6x8x128xf32, #tpu.memory_space<vmem>>) attributes {dimension_semantics = [#tpu.dimension_semantics<parallel>], iteration_bounds = array<i64: 1>, scalar_prefetch = 0 : i64, scratch_operands = 0 : i64, tpu.core_type = #tpu.core_type<tc>, window_params = [{transform_indices = @transform_0, window_bounds = array<i64: 2, 8, 128>}, {pipeline_mode = #tpu.pipeline_mode<synchronous>, transform_indices = @transform_1, window_bounds = array<i64: 128, 768>}, {transform_indices = @transform_2, window_bounds = array<i64: 2, 6, 8, 128>}]} {
    %c0 = arith.constant 0 : index
    %c0_0 = arith.constant 0 : index
    %c0_1 = arith.constant 0 : index
    %0 = vector.load %arg1[%c0, %c0_0, %c0_1] : memref<2x8x128xf32, #tpu.memory_space<vmem>>, vector<2x8x128xf32>
    %c0_2 = arith.constant 0 : index
    %c0_3 = arith.constant 0 : index
    %1 = vector.load %arg2[%c0_2, %c0_3] : memref<128x768xf32, #tpu.memory_space<vmem>>, vector<128x768xf32>
    %2 = vector.shape_cast %0 : vector<2x8x128xf32> to vector<16x128xf32>
    %cst = arith.constant dense<0.000000e+00> : vector<16x768xf32>
    %3 = tpu.matmul %2, %1, %cst {dimension_numbers = #tpu.dot_dimension_numbers<[1], [0], [0], [1], [0, 0, 1, 1], [], []>} : vector<16x128xf32>, vector<128x768xf32>, vector<16x768xf32> -> vector<16x768xf32>
    %4 = vector.extract_strided_slice %3 {offsets = [0, 0], sizes = [16, 128], strides = [1, 1]} : vector<16x768xf32> to vector<16x128xf32>
    %5 = vector.shape_cast %4 : vector<16x128xf32> to vector<2x8x128xf32>
    %6 = vector.extract_strided_slice %3 {offsets = [0, 128], sizes = [16, 128], strides = [1, 1]} : vector<16x768xf32> to vector<16x128xf32>
    %7 = vector.shape_cast %6 : vector<16x128xf32> to vector<2x8x128xf32>
    %8 = vector.extract_strided_slice %3 {offsets = [0, 256], sizes = [16, 128], strides = [1, 1]} : vector<16x768xf32> to vector<16x128xf32>
    %9 = vector.shape_cast %8 : vector<16x128xf32> to vector<2x8x128xf32>
    %10 = vector.extract_strided_slice %3 {offsets = [0, 384], sizes = [16, 128], strides = [1, 1]} : vector<16x768xf32> to vector<16x128xf32>
    %11 = vector.shape_cast %10 : vector<16x128xf32> to vector<2x8x128xf32>
    %12 = vector.extract_strided_slice %3 {offsets = [0, 512], sizes = [16, 128], strides = [1, 1]} : vector<16x768xf32> to vector<16x128xf32>
    %13 = vector.shape_cast %12 : vector<16x128xf32> to vector<2x8x128xf32>
    %14 = vector.extract_strided_slice %3 {offsets = [0, 640], sizes = [16, 128], strides = [1, 1]} : vector<16x768xf32> to vector<16x128xf32>
    %15 = vector.shape_cast %14 : vector<16x128xf32> to vector<2x8x128xf32>
    %16 = tpu.concatenate %5, %7, %9, %11, %13, %15 in 1 : vector<2x8x128xf32>, vector<2x8x128xf32>, vector<2x8x128xf32>, vector<2x8x128xf32>, vector<2x8x128xf32>, vector<2x8x128xf32> -> vector<2x48x128xf32>
    %cst_4 = arith.constant 0.000000e+00 : f32
    %17 = vector.broadcast %cst_4 : f32 to vector<2x120x128xf32>
    %18 = tpu.concatenate %0, %17 in 1 : vector<2x8x128xf32>, vector<2x120x128xf32> -> vector<2x128x128xf32>
    %cst_5 = arith.constant dense<0.000000e+00> : vector<2x48x128xf32>
    %19 = tpu.matmul %16, %18, %cst_5 {dimension_numbers = #tpu.dot_dimension_numbers<[2], [2], [1], [1], [0, 0, 0, 1, 1, 1], [0], [0]>} : vector<2x48x128xf32>, vector<2x128x128xf32>, vector<2x48x128xf32> -> vector<2x48x128xf32>
    %20 = vector.shape_cast %19 : vector<2x48x128xf32> to vector<2x6x8x128xf32>
    %c0_6 = arith.constant 0 : index
    %c0_7 = arith.constant 0 : index
    %c0_8 = arith.constant 0 : index
    %c0_9 = arith.constant 0 : index
    %21 = vector.load %arg3[%c0_6, %c0_7, %c0_8, %c0_9] : memref<2x6x8x128xf32, #tpu.memory_space<vmem>>, vector<2x6x8x128xf32>
    tpu.vector_store %arg3[%c0_6, %c0_7, %c0_8, %c0_9], %20 {strides = array<i32>} : memref<2x6x8x128xf32, #tpu.memory_space<vmem>>, vector<2x6x8x128xf32>,
    return
  }
  func.func @transform_0(%arg0: i32) -> (i32, i32, i32) {
    %c0_i32 = arith.constant 0 : i32
    %c0_i32_0 = arith.constant 0 : i32
    %c0_i32_1 = arith.constant 0 : i32
    return %arg0, %c0_i32, %c0_i32_0 : i32, i32, i32
  }
  func.func @transform_1(%arg0: i32) -> (i32, i32) {
    %c0_i32 = arith.constant 0 : i32
    %c0_i32_0 = arith.constant 0 : i32
    %c0_i32_1 = arith.constant 0 : i32
    return %c0_i32, %c0_i32_0 : i32, i32
  }
  func.func @transform_2(%arg0: i32) -> (i32, i32, i32, i32) {
    %c0_i32 = arith.constant 0 : i32
    %c0_i32_0 = arith.constant 0 : i32
    %c0_i32_1 = arith.constant 0 : i32
    %c0_i32_2 = arith.constant 0 : i32
    return %arg0, %c0_i32, %c0_i32_0, %c0_i32_1 : i32, i32, i32, i32
  }
}

module attributes {stable_mosaic.version = 11 : i64} {
  func.func @bilstm_kernel(%arg0: i32, %arg1: memref<16x32xf32, #tpu.memory_space<vmem>>, %arg2: memref<32x256xf32, #tpu.memory_space<vmem>>, %arg3: memref<64x256xf32, #tpu.memory_space<vmem>>, %arg4: memref<1x256xf32, #tpu.memory_space<vmem>>, %arg5: memref<2x512xf32, #tpu.memory_space<vmem>>) attributes {dimension_semantics = [#tpu.dimension_semantics<arbitrary>], iteration_bounds = array<i64: 1>, scalar_prefetch = 0 : i64, scratch_operands = 0 : i64, tpu.core_type = #tpu.core_type<tc>, window_params = [{pipeline_mode = #tpu.pipeline_mode<synchronous>, transform_indices = @transform_0, window_bounds = array<i64: 16, 32>}, {pipeline_mode = #tpu.pipeline_mode<synchronous>, transform_indices = @transform_1, window_bounds = array<i64: 32, 256>}, {pipeline_mode = #tpu.pipeline_mode<synchronous>, transform_indices = @transform_2, window_bounds = array<i64: 64, 256>}, {pipeline_mode = #tpu.pipeline_mode<synchronous>, transform_indices = @transform_3, window_bounds = array<i64: 1, 256>}, {pipeline_mode = #tpu.pipeline_mode<synchronous>, transform_indices = @transform_4, window_bounds = array<i64: 2, 512>}]} {
    %c0 = arith.constant 0 : index
    %c0_0 = arith.constant 0 : index
    %0 = vector.load %arg1[%c0, %c0_0] : memref<16x32xf32, #tpu.memory_space<vmem>>, vector<16x32xf32>
    %c0_1 = arith.constant 0 : index
    %c0_2 = arith.constant 0 : index
    %1 = vector.load %arg2[%c0_1, %c0_2] : memref<32x256xf32, #tpu.memory_space<vmem>>, vector<32x256xf32>
    %c0_3 = arith.constant 0 : index
    %c0_4 = arith.constant 0 : index
    %2 = vector.load %arg3[%c0_3, %c0_4] : memref<64x256xf32, #tpu.memory_space<vmem>>, vector<64x256xf32>
    %c0_5 = arith.constant 0 : index
    %c0_6 = arith.constant 0 : index
    %3 = vector.load %arg4[%c0_5, %c0_6] : memref<1x256xf32, #tpu.memory_space<vmem>>, vector<1x256xf32>
    %cst = arith.constant dense<0.000000e+00> : vector<16x256xf32>
    %4 = tpu.matmul %0, %1, %cst {dimension_numbers = #tpu.dot_dimension_numbers<[1], [0], [0], [1], [0, 0, 1, 1], [], []>} : vector<16x32xf32>, vector<32x256xf32>, vector<16x256xf32> -> vector<16x256xf32>
    %5 = vector.broadcast %3 : vector<1x256xf32> to vector<16x256xf32>
    %6 = arith.addf %4, %5 : vector<16x256xf32>
    %cst_7 = arith.constant 0.000000e+00 : f32
    %7 = vector.broadcast %cst_7 : f32 to vector<2x64xf32>
    %cst_8 = arith.constant 0.000000e+00 : f32
    %8 = vector.broadcast %cst_8 : f32 to vector<2x32xf32>
    %cst_9 = arith.constant 0.000000e+00 : f32
    %9 = vector.broadcast %cst_9 : f32 to vector<2x32xf32>
    %cst_10 = arith.constant dense<0.000000e+00> : vector<2x256xf32>
    %10 = tpu.matmul %7, %2, %cst_10 {dimension_numbers = #tpu.dot_dimension_numbers<[1], [0], [0], [1], [0, 0, 1, 1], [], []>} : vector<2x64xf32>, vector<64x256xf32>, vector<2x256xf32> -> vector<2x256xf32>
    %11 = vector.extract_strided_slice %6 {offsets = [0, 0], sizes = [2, 128], strides = [1, 1]} : vector<16x256xf32> to vector<2x128xf32>
    %12 = vector.extract_strided_slice %10 {offsets = [0, 0], sizes = [2, 128], strides = [1, 1]} : vector<2x256xf32> to vector<2x128xf32>
    %13 = arith.addf %11, %12 : vector<2x128xf32>
    %14 = vector.extract_strided_slice %6 {offsets = [14, 128], sizes = [2, 128], strides = [1, 1]} : vector<16x256xf32> to vector<2x128xf32>
    %15 = vector.extract_strided_slice %10 {offsets = [0, 128], sizes = [2, 128], strides = [1, 1]} : vector<2x256xf32> to vector<2x128xf32>
    %16 = arith.addf %14, %15 : vector<2x128xf32>
    %17 = vector.extract_strided_slice %13 {offsets = [0, 0], sizes = [2, 32], strides = [1, 1]} : vector<2x128xf32> to vector<2x32xf32>
    %18 = arith.negf %17 : vector<2x32xf32>
    %19 = math.exp %18 : vector<2x32xf32>
    %cst_11 = arith.constant 1.000000e+00 : f32
    %20 = vector.broadcast %cst_11 : f32 to vector<2x32xf32>
    %21 = arith.addf %20, %19 : vector<2x32xf32>
    %22 = arith.divf %20, %21 : vector<2x32xf32>
    %23 = vector.extract_strided_slice %13 {offsets = [0, 32], sizes = [2, 32], strides = [1, 1]} : vector<2x128xf32> to vector<2x32xf32>
    %24 = arith.negf %23 : vector<2x32xf32>
    %25 = math.exp %24 : vector<2x32xf32>
    %cst_12 = arith.constant 1.000000e+00 : f32
    %26 = vector.broadcast %cst_12 : f32 to vector<2x32xf32>
    %27 = arith.addf %26, %25 : vector<2x32xf32>
    %28 = arith.divf %26, %27 : vector<2x32xf32>
    %29 = vector.extract_strided_slice %13 {offsets = [0, 64], sizes = [2, 32], strides = [1, 1]} : vector<2x128xf32> to vector<2x32xf32>
    %30 = math.tanh %29 : vector<2x32xf32>
    %31 = vector.extract_strided_slice %13 {offsets = [0, 96], sizes = [2, 32], strides = [1, 1]} : vector<2x128xf32> to vector<2x32xf32>
    %32 = arith.negf %31 : vector<2x32xf32>
    %33 = math.exp %32 : vector<2x32xf32>
    %cst_13 = arith.constant 1.000000e+00 : f32
    %34 = vector.broadcast %cst_13 : f32 to vector<2x32xf32>
    %35 = arith.addf %34, %33 : vector<2x32xf32>
    %36 = arith.divf %34, %35 : vector<2x32xf32>
    %37 = arith.mulf %28, %8 : vector<2x32xf32>
    %38 = arith.mulf %22, %30 : vector<2x32xf32>
    %39 = arith.addf %37, %38 : vector<2x32xf32>
    %40 = math.tanh %39 : vector<2x32xf32>
    %41 = arith.mulf %36, %40 : vector<2x32xf32>
    %42 = vector.extract_strided_slice %16 {offsets = [0, 0], sizes = [2, 32], strides = [1, 1]} : vector<2x128xf32> to vector<2x32xf32>
    %43 = arith.negf %42 : vector<2x32xf32>
    %44 = math.exp %43 : vector<2x32xf32>
    %cst_14 = arith.constant 1.000000e+00 : f32
    %45 = vector.broadcast %cst_14 : f32 to vector<2x32xf32>
    %46 = arith.addf %45, %44 : vector<2x32xf32>
    %47 = arith.divf %45, %46 : vector<2x32xf32>
    %48 = vector.extract_strided_slice %16 {offsets = [0, 32], sizes = [2, 32], strides = [1, 1]} : vector<2x128xf32> to vector<2x32xf32>
    %49 = arith.negf %48 : vector<2x32xf32>
    %50 = math.exp %49 : vector<2x32xf32>
    %cst_15 = arith.constant 1.000000e+00 : f32
    %51 = vector.broadcast %cst_15 : f32 to vector<2x32xf32>
    %52 = arith.addf %51, %50 : vector<2x32xf32>
    %53 = arith.divf %51, %52 : vector<2x32xf32>
    %54 = vector.extract_strided_slice %16 {offsets = [0, 64], sizes = [2, 32], strides = [1, 1]} : vector<2x128xf32> to vector<2x32xf32>
    %55 = math.tanh %54 : vector<2x32xf32>
    %56 = vector.extract_strided_slice %16 {offsets = [0, 96], sizes = [2, 32], strides = [1, 1]} : vector<2x128xf32> to vector<2x32xf32>
    %57 = arith.negf %56 : vector<2x32xf32>
    %58 = math.exp %57 : vector<2x32xf32>
    %cst_16 = arith.constant 1.000000e+00 : f32
    %59 = vector.broadcast %cst_16 : f32 to vector<2x32xf32>
    %60 = arith.addf %59, %58 : vector<2x32xf32>
    %61 = arith.divf %59, %60 : vector<2x32xf32>
    %62 = arith.mulf %53, %9 : vector<2x32xf32>
    %63 = arith.mulf %47, %55 : vector<2x32xf32>
    %64 = arith.addf %62, %63 : vector<2x32xf32>
    %65 = math.tanh %64 : vector<2x32xf32>
    %66 = arith.mulf %61, %65 : vector<2x32xf32>
    %67 = tpu.concatenate %41, %66 in 1 : vector<2x32xf32>, vector<2x32xf32> -> vector<2x64xf32>
    %cst_17 = arith.constant dense<0.000000e+00> : vector<2x256xf32>
    %68 = tpu.matmul %67, %2, %cst_17 {dimension_numbers = #tpu.dot_dimension_numbers<[1], [0], [0], [1], [0, 0, 1, 1], [], []>} : vector<2x64xf32>, vector<64x256xf32>, vector<2x256xf32> -> vector<2x256xf32>
    %69 = vector.extract_strided_slice %6 {offsets = [2, 0], sizes = [2, 128], strides = [1, 1]} : vector<16x256xf32> to vector<2x128xf32>
    %70 = vector.extract_strided_slice %68 {offsets = [0, 0], sizes = [2, 128], strides = [1, 1]} : vector<2x256xf32> to vector<2x128xf32>
    %71 = arith.addf %69, %70 : vector<2x128xf32>
    %72 = vector.extract_strided_slice %6 {offsets = [12, 128], sizes = [2, 128], strides = [1, 1]} : vector<16x256xf32> to vector<2x128xf32>
    %73 = vector.extract_strided_slice %68 {offsets = [0, 128], sizes = [2, 128], strides = [1, 1]} : vector<2x256xf32> to vector<2x128xf32>
    %74 = arith.addf %72, %73 : vector<2x128xf32>
    %75 = vector.extract_strided_slice %71 {offsets = [0, 0], sizes = [2, 32], strides = [1, 1]} : vector<2x128xf32> to vector<2x32xf32>
    %76 = arith.negf %75 : vector<2x32xf32>
    %77 = math.exp %76 : vector<2x32xf32>
    %cst_18 = arith.constant 1.000000e+00 : f32
    %78 = vector.broadcast %cst_18 : f32 to vector<2x32xf32>
    %79 = arith.addf %78, %77 : vector<2x32xf32>
    %80 = arith.divf %78, %79 : vector<2x32xf32>
    %81 = vector.extract_strided_slice %71 {offsets = [0, 32], sizes = [2, 32], strides = [1, 1]} : vector<2x128xf32> to vector<2x32xf32>
    %82 = arith.negf %81 : vector<2x32xf32>
    %83 = math.exp %82 : vector<2x32xf32>
    %cst_19 = arith.constant 1.000000e+00 : f32
    %84 = vector.broadcast %cst_19 : f32 to vector<2x32xf32>
    %85 = arith.addf %84, %83 : vector<2x32xf32>
    %86 = arith.divf %84, %85 : vector<2x32xf32>
    %87 = vector.extract_strided_slice %71 {offsets = [0, 64], sizes = [2, 32], strides = [1, 1]} : vector<2x128xf32> to vector<2x32xf32>
    %88 = math.tanh %87 : vector<2x32xf32>
    %89 = vector.extract_strided_slice %71 {offsets = [0, 96], sizes = [2, 32], strides = [1, 1]} : vector<2x128xf32> to vector<2x32xf32>
    %90 = arith.negf %89 : vector<2x32xf32>
    %91 = math.exp %90 : vector<2x32xf32>
    %cst_20 = arith.constant 1.000000e+00 : f32
    %92 = vector.broadcast %cst_20 : f32 to vector<2x32xf32>
    %93 = arith.addf %92, %91 : vector<2x32xf32>
    %94 = arith.divf %92, %93 : vector<2x32xf32>
    %95 = arith.mulf %86, %39 : vector<2x32xf32>
    %96 = arith.mulf %80, %88 : vector<2x32xf32>
    %97 = arith.addf %95, %96 : vector<2x32xf32>
    %98 = math.tanh %97 : vector<2x32xf32>
    %99 = arith.mulf %94, %98 : vector<2x32xf32>
    %100 = vector.extract_strided_slice %74 {offsets = [0, 0], sizes = [2, 32], strides = [1, 1]} : vector<2x128xf32> to vector<2x32xf32>
    %101 = arith.negf %100 : vector<2x32xf32>
    %102 = math.exp %101 : vector<2x32xf32>
    %cst_21 = arith.constant 1.000000e+00 : f32
    %103 = vector.broadcast %cst_21 : f32 to vector<2x32xf32>
    %104 = arith.addf %103, %102 : vector<2x32xf32>
    %105 = arith.divf %103, %104 : vector<2x32xf32>
    %106 = vector.extract_strided_slice %74 {offsets = [0, 32], sizes = [2, 32], strides = [1, 1]} : vector<2x128xf32> to vector<2x32xf32>
    %107 = arith.negf %106 : vector<2x32xf32>
    %108 = math.exp %107 : vector<2x32xf32>
    %cst_22 = arith.constant 1.000000e+00 : f32
    %109 = vector.broadcast %cst_22 : f32 to vector<2x32xf32>
    %110 = arith.addf %109, %108 : vector<2x32xf32>
    %111 = arith.divf %109, %110 : vector<2x32xf32>
    %112 = vector.extract_strided_slice %74 {offsets = [0, 64], sizes = [2, 32], strides = [1, 1]} : vector<2x128xf32> to vector<2x32xf32>
    %113 = math.tanh %112 : vector<2x32xf32>
    %114 = vector.extract_strided_slice %74 {offsets = [0, 96], sizes = [2, 32], strides = [1, 1]} : vector<2x128xf32> to vector<2x32xf32>
    %115 = arith.negf %114 : vector<2x32xf32>
    %116 = math.exp %115 : vector<2x32xf32>
    %cst_23 = arith.constant 1.000000e+00 : f32
    %117 = vector.broadcast %cst_23 : f32 to vector<2x32xf32>
    %118 = arith.addf %117, %116 : vector<2x32xf32>
    %119 = arith.divf %117, %118 : vector<2x32xf32>
    %120 = arith.mulf %111, %64 : vector<2x32xf32>
    %121 = arith.mulf %105, %113 : vector<2x32xf32>
    %122 = arith.addf %120, %121 : vector<2x32xf32>
    %123 = math.tanh %122 : vector<2x32xf32>
    %124 = arith.mulf %119, %123 : vector<2x32xf32>
    %125 = tpu.concatenate %99, %124 in 1 : vector<2x32xf32>, vector<2x32xf32> -> vector<2x64xf32>
    %cst_24 = arith.constant dense<0.000000e+00> : vector<2x256xf32>
    %126 = tpu.matmul %125, %2, %cst_24 {dimension_numbers = #tpu.dot_dimension_numbers<[1], [0], [0], [1], [0, 0, 1, 1], [], []>} : vector<2x64xf32>, vector<64x256xf32>, vector<2x256xf32> -> vector<2x256xf32>
    %127 = vector.extract_strided_slice %6 {offsets = [4, 0], sizes = [2, 128], strides = [1, 1]} : vector<16x256xf32> to vector<2x128xf32>
    %128 = vector.extract_strided_slice %126 {offsets = [0, 0], sizes = [2, 128], strides = [1, 1]} : vector<2x256xf32> to vector<2x128xf32>
    %129 = arith.addf %127, %128 : vector<2x128xf32>
    %130 = vector.extract_strided_slice %6 {offsets = [10, 128], sizes = [2, 128], strides = [1, 1]} : vector<16x256xf32> to vector<2x128xf32>
    %131 = vector.extract_strided_slice %126 {offsets = [0, 128], sizes = [2, 128], strides = [1, 1]} : vector<2x256xf32> to vector<2x128xf32>
    %132 = arith.addf %130, %131 : vector<2x128xf32>
    %133 = vector.extract_strided_slice %129 {offsets = [0, 0], sizes = [2, 32], strides = [1, 1]} : vector<2x128xf32> to vector<2x32xf32>
    %134 = arith.negf %133 : vector<2x32xf32>
    %135 = math.exp %134 : vector<2x32xf32>
    %cst_25 = arith.constant 1.000000e+00 : f32
    %136 = vector.broadcast %cst_25 : f32 to vector<2x32xf32>
    %137 = arith.addf %136, %135 : vector<2x32xf32>
    %138 = arith.divf %136, %137 : vector<2x32xf32>
    %139 = vector.extract_strided_slice %129 {offsets = [0, 32], sizes = [2, 32], strides = [1, 1]} : vector<2x128xf32> to vector<2x32xf32>
    %140 = arith.negf %139 : vector<2x32xf32>
    %141 = math.exp %140 : vector<2x32xf32>
    %cst_26 = arith.constant 1.000000e+00 : f32
    %142 = vector.broadcast %cst_26 : f32 to vector<2x32xf32>
    %143 = arith.addf %142, %141 : vector<2x32xf32>
    %144 = arith.divf %142, %143 : vector<2x32xf32>
    %145 = vector.extract_strided_slice %129 {offsets = [0, 64], sizes = [2, 32], strides = [1, 1]} : vector<2x128xf32> to vector<2x32xf32>
    %146 = math.tanh %145 : vector<2x32xf32>
    %147 = vector.extract_strided_slice %129 {offsets = [0, 96], sizes = [2, 32], strides = [1, 1]} : vector<2x128xf32> to vector<2x32xf32>
    %148 = arith.negf %147 : vector<2x32xf32>
    %149 = math.exp %148 : vector<2x32xf32>
    %cst_27 = arith.constant 1.000000e+00 : f32
    %150 = vector.broadcast %cst_27 : f32 to vector<2x32xf32>
    %151 = arith.addf %150, %149 : vector<2x32xf32>
    %152 = arith.divf %150, %151 : vector<2x32xf32>
    %153 = arith.mulf %144, %97 : vector<2x32xf32>
    %154 = arith.mulf %138, %146 : vector<2x32xf32>
    %155 = arith.addf %153, %154 : vector<2x32xf32>
    %156 = math.tanh %155 : vector<2x32xf32>
    %157 = arith.mulf %152, %156 : vector<2x32xf32>
    %158 = vector.extract_strided_slice %132 {offsets = [0, 0], sizes = [2, 32], strides = [1, 1]} : vector<2x128xf32> to vector<2x32xf32>
    %159 = arith.negf %158 : vector<2x32xf32>
    %160 = math.exp %159 : vector<2x32xf32>
    %cst_28 = arith.constant 1.000000e+00 : f32
    %161 = vector.broadcast %cst_28 : f32 to vector<2x32xf32>
    %162 = arith.addf %161, %160 : vector<2x32xf32>
    %163 = arith.divf %161, %162 : vector<2x32xf32>
    %164 = vector.extract_strided_slice %132 {offsets = [0, 32], sizes = [2, 32], strides = [1, 1]} : vector<2x128xf32> to vector<2x32xf32>
    %165 = arith.negf %164 : vector<2x32xf32>
    %166 = math.exp %165 : vector<2x32xf32>
    %cst_29 = arith.constant 1.000000e+00 : f32
    %167 = vector.broadcast %cst_29 : f32 to vector<2x32xf32>
    %168 = arith.addf %167, %166 : vector<2x32xf32>
    %169 = arith.divf %167, %168 : vector<2x32xf32>
    %170 = vector.extract_strided_slice %132 {offsets = [0, 64], sizes = [2, 32], strides = [1, 1]} : vector<2x128xf32> to vector<2x32xf32>
    %171 = math.tanh %170 : vector<2x32xf32>
    %172 = vector.extract_strided_slice %132 {offsets = [0, 96], sizes = [2, 32], strides = [1, 1]} : vector<2x128xf32> to vector<2x32xf32>
    %173 = arith.negf %172 : vector<2x32xf32>
    %174 = math.exp %173 : vector<2x32xf32>
    %cst_30 = arith.constant 1.000000e+00 : f32
    %175 = vector.broadcast %cst_30 : f32 to vector<2x32xf32>
    %176 = arith.addf %175, %174 : vector<2x32xf32>
    %177 = arith.divf %175, %176 : vector<2x32xf32>
    %178 = arith.mulf %169, %122 : vector<2x32xf32>
    %179 = arith.mulf %163, %171 : vector<2x32xf32>
    %180 = arith.addf %178, %179 : vector<2x32xf32>
    %181 = math.tanh %180 : vector<2x32xf32>
    %182 = arith.mulf %177, %181 : vector<2x32xf32>
    %183 = tpu.concatenate %157, %182 in 1 : vector<2x32xf32>, vector<2x32xf32> -> vector<2x64xf32>
    %cst_31 = arith.constant dense<0.000000e+00> : vector<2x256xf32>
    %184 = tpu.matmul %183, %2, %cst_31 {dimension_numbers = #tpu.dot_dimension_numbers<[1], [0], [0], [1], [0, 0, 1, 1], [], []>} : vector<2x64xf32>, vector<64x256xf32>, vector<2x256xf32> -> vector<2x256xf32>
    %185 = vector.extract_strided_slice %6 {offsets = [6, 0], sizes = [2, 128], strides = [1, 1]} : vector<16x256xf32> to vector<2x128xf32>
    %186 = vector.extract_strided_slice %184 {offsets = [0, 0], sizes = [2, 128], strides = [1, 1]} : vector<2x256xf32> to vector<2x128xf32>
    %187 = arith.addf %185, %186 : vector<2x128xf32>
    %188 = vector.extract_strided_slice %6 {offsets = [8, 128], sizes = [2, 128], strides = [1, 1]} : vector<16x256xf32> to vector<2x128xf32>
    %189 = vector.extract_strided_slice %184 {offsets = [0, 128], sizes = [2, 128], strides = [1, 1]} : vector<2x256xf32> to vector<2x128xf32>
    %190 = arith.addf %188, %189 : vector<2x128xf32>
    %191 = vector.extract_strided_slice %187 {offsets = [0, 0], sizes = [2, 32], strides = [1, 1]} : vector<2x128xf32> to vector<2x32xf32>
    %192 = arith.negf %191 : vector<2x32xf32>
    %193 = math.exp %192 : vector<2x32xf32>
    %cst_32 = arith.constant 1.000000e+00 : f32
    %194 = vector.broadcast %cst_32 : f32 to vector<2x32xf32>
    %195 = arith.addf %194, %193 : vector<2x32xf32>
    %196 = arith.divf %194, %195 : vector<2x32xf32>
    %197 = vector.extract_strided_slice %187 {offsets = [0, 32], sizes = [2, 32], strides = [1, 1]} : vector<2x128xf32> to vector<2x32xf32>
    %198 = arith.negf %197 : vector<2x32xf32>
    %199 = math.exp %198 : vector<2x32xf32>
    %cst_33 = arith.constant 1.000000e+00 : f32
    %200 = vector.broadcast %cst_33 : f32 to vector<2x32xf32>
    %201 = arith.addf %200, %199 : vector<2x32xf32>
    %202 = arith.divf %200, %201 : vector<2x32xf32>
    %203 = vector.extract_strided_slice %187 {offsets = [0, 64], sizes = [2, 32], strides = [1, 1]} : vector<2x128xf32> to vector<2x32xf32>
    %204 = math.tanh %203 : vector<2x32xf32>
    %205 = vector.extract_strided_slice %187 {offsets = [0, 96], sizes = [2, 32], strides = [1, 1]} : vector<2x128xf32> to vector<2x32xf32>
    %206 = arith.negf %205 : vector<2x32xf32>
    %207 = math.exp %206 : vector<2x32xf32>
    %cst_34 = arith.constant 1.000000e+00 : f32
    %208 = vector.broadcast %cst_34 : f32 to vector<2x32xf32>
    %209 = arith.addf %208, %207 : vector<2x32xf32>
    %210 = arith.divf %208, %209 : vector<2x32xf32>
    %211 = arith.mulf %202, %155 : vector<2x32xf32>
    %212 = arith.mulf %196, %204 : vector<2x32xf32>
    %213 = arith.addf %211, %212 : vector<2x32xf32>
    %214 = math.tanh %213 : vector<2x32xf32>
    %215 = arith.mulf %210, %214 : vector<2x32xf32>
    %216 = vector.extract_strided_slice %190 {offsets = [0, 0], sizes = [2, 32], strides = [1, 1]} : vector<2x128xf32> to vector<2x32xf32>
    %217 = arith.negf %216 : vector<2x32xf32>
    %218 = math.exp %217 : vector<2x32xf32>
    %cst_35 = arith.constant 1.000000e+00 : f32
    %219 = vector.broadcast %cst_35 : f32 to vector<2x32xf32>
    %220 = arith.addf %219, %218 : vector<2x32xf32>
    %221 = arith.divf %219, %220 : vector<2x32xf32>
    %222 = vector.extract_strided_slice %190 {offsets = [0, 32], sizes = [2, 32], strides = [1, 1]} : vector<2x128xf32> to vector<2x32xf32>
    %223 = arith.negf %222 : vector<2x32xf32>
    %224 = math.exp %223 : vector<2x32xf32>
    %cst_36 = arith.constant 1.000000e+00 : f32
    %225 = vector.broadcast %cst_36 : f32 to vector<2x32xf32>
    %226 = arith.addf %225, %224 : vector<2x32xf32>
    %227 = arith.divf %225, %226 : vector<2x32xf32>
    %228 = vector.extract_strided_slice %190 {offsets = [0, 64], sizes = [2, 32], strides = [1, 1]} : vector<2x128xf32> to vector<2x32xf32>
    %229 = math.tanh %228 : vector<2x32xf32>
    %230 = vector.extract_strided_slice %190 {offsets = [0, 96], sizes = [2, 32], strides = [1, 1]} : vector<2x128xf32> to vector<2x32xf32>
    %231 = arith.negf %230 : vector<2x32xf32>
    %232 = math.exp %231 : vector<2x32xf32>
    %cst_37 = arith.constant 1.000000e+00 : f32
    %233 = vector.broadcast %cst_37 : f32 to vector<2x32xf32>
    %234 = arith.addf %233, %232 : vector<2x32xf32>
    %235 = arith.divf %233, %234 : vector<2x32xf32>
    %236 = arith.mulf %227, %180 : vector<2x32xf32>
    %237 = arith.mulf %221, %229 : vector<2x32xf32>
    %238 = arith.addf %236, %237 : vector<2x32xf32>
    %239 = math.tanh %238 : vector<2x32xf32>
    %240 = arith.mulf %235, %239 : vector<2x32xf32>
    %241 = tpu.concatenate %215, %240 in 1 : vector<2x32xf32>, vector<2x32xf32> -> vector<2x64xf32>
    %cst_38 = arith.constant dense<0.000000e+00> : vector<2x256xf32>
    %242 = tpu.matmul %241, %2, %cst_38 {dimension_numbers = #tpu.dot_dimension_numbers<[1], [0], [0], [1], [0, 0, 1, 1], [], []>} : vector<2x64xf32>, vector<64x256xf32>, vector<2x256xf32> -> vector<2x256xf32>
    %243 = vector.extract_strided_slice %6 {offsets = [8, 0], sizes = [2, 128], strides = [1, 1]} : vector<16x256xf32> to vector<2x128xf32>
    %244 = vector.extract_strided_slice %242 {offsets = [0, 0], sizes = [2, 128], strides = [1, 1]} : vector<2x256xf32> to vector<2x128xf32>
    %245 = arith.addf %243, %244 : vector<2x128xf32>
    %246 = vector.extract_strided_slice %6 {offsets = [6, 128], sizes = [2, 128], strides = [1, 1]} : vector<16x256xf32> to vector<2x128xf32>
    %247 = vector.extract_strided_slice %242 {offsets = [0, 128], sizes = [2, 128], strides = [1, 1]} : vector<2x256xf32> to vector<2x128xf32>
    %248 = arith.addf %246, %247 : vector<2x128xf32>
    %249 = vector.extract_strided_slice %245 {offsets = [0, 0], sizes = [2, 32], strides = [1, 1]} : vector<2x128xf32> to vector<2x32xf32>
    %250 = arith.negf %249 : vector<2x32xf32>
    %251 = math.exp %250 : vector<2x32xf32>
    %cst_39 = arith.constant 1.000000e+00 : f32
    %252 = vector.broadcast %cst_39 : f32 to vector<2x32xf32>
    %253 = arith.addf %252, %251 : vector<2x32xf32>
    %254 = arith.divf %252, %253 : vector<2x32xf32>
    %255 = vector.extract_strided_slice %245 {offsets = [0, 32], sizes = [2, 32], strides = [1, 1]} : vector<2x128xf32> to vector<2x32xf32>
    %256 = arith.negf %255 : vector<2x32xf32>
    %257 = math.exp %256 : vector<2x32xf32>
    %cst_40 = arith.constant 1.000000e+00 : f32
    %258 = vector.broadcast %cst_40 : f32 to vector<2x32xf32>
    %259 = arith.addf %258, %257 : vector<2x32xf32>
    %260 = arith.divf %258, %259 : vector<2x32xf32>
    %261 = vector.extract_strided_slice %245 {offsets = [0, 64], sizes = [2, 32], strides = [1, 1]} : vector<2x128xf32> to vector<2x32xf32>
    %262 = math.tanh %261 : vector<2x32xf32>
    %263 = vector.extract_strided_slice %245 {offsets = [0, 96], sizes = [2, 32], strides = [1, 1]} : vector<2x128xf32> to vector<2x32xf32>
    %264 = arith.negf %263 : vector<2x32xf32>
    %265 = math.exp %264 : vector<2x32xf32>
    %cst_41 = arith.constant 1.000000e+00 : f32
    %266 = vector.broadcast %cst_41 : f32 to vector<2x32xf32>
    %267 = arith.addf %266, %265 : vector<2x32xf32>
    %268 = arith.divf %266, %267 : vector<2x32xf32>
    %269 = arith.mulf %260, %213 : vector<2x32xf32>
    %270 = arith.mulf %254, %262 : vector<2x32xf32>
    %271 = arith.addf %269, %270 : vector<2x32xf32>
    %272 = math.tanh %271 : vector<2x32xf32>
    %273 = arith.mulf %268, %272 : vector<2x32xf32>
    %274 = vector.extract_strided_slice %248 {offsets = [0, 0], sizes = [2, 32], strides = [1, 1]} : vector<2x128xf32> to vector<2x32xf32>
    %275 = arith.negf %274 : vector<2x32xf32>
    %276 = math.exp %275 : vector<2x32xf32>
    %cst_42 = arith.constant 1.000000e+00 : f32
    %277 = vector.broadcast %cst_42 : f32 to vector<2x32xf32>
    %278 = arith.addf %277, %276 : vector<2x32xf32>
    %279 = arith.divf %277, %278 : vector<2x32xf32>
    %280 = vector.extract_strided_slice %248 {offsets = [0, 32], sizes = [2, 32], strides = [1, 1]} : vector<2x128xf32> to vector<2x32xf32>
    %281 = arith.negf %280 : vector<2x32xf32>
    %282 = math.exp %281 : vector<2x32xf32>
    %cst_43 = arith.constant 1.000000e+00 : f32
    %283 = vector.broadcast %cst_43 : f32 to vector<2x32xf32>
    %284 = arith.addf %283, %282 : vector<2x32xf32>
    %285 = arith.divf %283, %284 : vector<2x32xf32>
    %286 = vector.extract_strided_slice %248 {offsets = [0, 64], sizes = [2, 32], strides = [1, 1]} : vector<2x128xf32> to vector<2x32xf32>
    %287 = math.tanh %286 : vector<2x32xf32>
    %288 = vector.extract_strided_slice %248 {offsets = [0, 96], sizes = [2, 32], strides = [1, 1]} : vector<2x128xf32> to vector<2x32xf32>
    %289 = arith.negf %288 : vector<2x32xf32>
    %290 = math.exp %289 : vector<2x32xf32>
    %cst_44 = arith.constant 1.000000e+00 : f32
    %291 = vector.broadcast %cst_44 : f32 to vector<2x32xf32>
    %292 = arith.addf %291, %290 : vector<2x32xf32>
    %293 = arith.divf %291, %292 : vector<2x32xf32>
    %294 = arith.mulf %285, %238 : vector<2x32xf32>
    %295 = arith.mulf %279, %287 : vector<2x32xf32>
    %296 = arith.addf %294, %295 : vector<2x32xf32>
    %297 = math.tanh %296 : vector<2x32xf32>
    %298 = arith.mulf %293, %297 : vector<2x32xf32>
    %299 = tpu.concatenate %273, %298 in 1 : vector<2x32xf32>, vector<2x32xf32> -> vector<2x64xf32>
    %cst_45 = arith.constant dense<0.000000e+00> : vector<2x256xf32>
    %300 = tpu.matmul %299, %2, %cst_45 {dimension_numbers = #tpu.dot_dimension_numbers<[1], [0], [0], [1], [0, 0, 1, 1], [], []>} : vector<2x64xf32>, vector<64x256xf32>, vector<2x256xf32> -> vector<2x256xf32>
    %301 = vector.extract_strided_slice %6 {offsets = [10, 0], sizes = [2, 128], strides = [1, 1]} : vector<16x256xf32> to vector<2x128xf32>
    %302 = vector.extract_strided_slice %300 {offsets = [0, 0], sizes = [2, 128], strides = [1, 1]} : vector<2x256xf32> to vector<2x128xf32>
    %303 = arith.addf %301, %302 : vector<2x128xf32>
    %304 = vector.extract_strided_slice %6 {offsets = [4, 128], sizes = [2, 128], strides = [1, 1]} : vector<16x256xf32> to vector<2x128xf32>
    %305 = vector.extract_strided_slice %300 {offsets = [0, 128], sizes = [2, 128], strides = [1, 1]} : vector<2x256xf32> to vector<2x128xf32>
    %306 = arith.addf %304, %305 : vector<2x128xf32>
    %307 = vector.extract_strided_slice %303 {offsets = [0, 0], sizes = [2, 32], strides = [1, 1]} : vector<2x128xf32> to vector<2x32xf32>
    %308 = arith.negf %307 : vector<2x32xf32>
    %309 = math.exp %308 : vector<2x32xf32>
    %cst_46 = arith.constant 1.000000e+00 : f32
    %310 = vector.broadcast %cst_46 : f32 to vector<2x32xf32>
    %311 = arith.addf %310, %309 : vector<2x32xf32>
    %312 = arith.divf %310, %311 : vector<2x32xf32>
    %313 = vector.extract_strided_slice %303 {offsets = [0, 32], sizes = [2, 32], strides = [1, 1]} : vector<2x128xf32> to vector<2x32xf32>
    %314 = arith.negf %313 : vector<2x32xf32>
    %315 = math.exp %314 : vector<2x32xf32>
    %cst_47 = arith.constant 1.000000e+00 : f32
    %316 = vector.broadcast %cst_47 : f32 to vector<2x32xf32>
    %317 = arith.addf %316, %315 : vector<2x32xf32>
    %318 = arith.divf %316, %317 : vector<2x32xf32>
    %319 = vector.extract_strided_slice %303 {offsets = [0, 64], sizes = [2, 32], strides = [1, 1]} : vector<2x128xf32> to vector<2x32xf32>
    %320 = math.tanh %319 : vector<2x32xf32>
    %321 = vector.extract_strided_slice %303 {offsets = [0, 96], sizes = [2, 32], strides = [1, 1]} : vector<2x128xf32> to vector<2x32xf32>
    %322 = arith.negf %321 : vector<2x32xf32>
    %323 = math.exp %322 : vector<2x32xf32>
    %cst_48 = arith.constant 1.000000e+00 : f32
    %324 = vector.broadcast %cst_48 : f32 to vector<2x32xf32>
    %325 = arith.addf %324, %323 : vector<2x32xf32>
    %326 = arith.divf %324, %325 : vector<2x32xf32>
    %327 = arith.mulf %318, %271 : vector<2x32xf32>
    %328 = arith.mulf %312, %320 : vector<2x32xf32>
    %329 = arith.addf %327, %328 : vector<2x32xf32>
    %330 = math.tanh %329 : vector<2x32xf32>
    %331 = arith.mulf %326, %330 : vector<2x32xf32>
    %332 = vector.extract_strided_slice %306 {offsets = [0, 0], sizes = [2, 32], strides = [1, 1]} : vector<2x128xf32> to vector<2x32xf32>
    %333 = arith.negf %332 : vector<2x32xf32>
    %334 = math.exp %333 : vector<2x32xf32>
    %cst_49 = arith.constant 1.000000e+00 : f32
    %335 = vector.broadcast %cst_49 : f32 to vector<2x32xf32>
    %336 = arith.addf %335, %334 : vector<2x32xf32>
    %337 = arith.divf %335, %336 : vector<2x32xf32>
    %338 = vector.extract_strided_slice %306 {offsets = [0, 32], sizes = [2, 32], strides = [1, 1]} : vector<2x128xf32> to vector<2x32xf32>
    %339 = arith.negf %338 : vector<2x32xf32>
    %340 = math.exp %339 : vector<2x32xf32>
    %cst_50 = arith.constant 1.000000e+00 : f32
    %341 = vector.broadcast %cst_50 : f32 to vector<2x32xf32>
    %342 = arith.addf %341, %340 : vector<2x32xf32>
    %343 = arith.divf %341, %342 : vector<2x32xf32>
    %344 = vector.extract_strided_slice %306 {offsets = [0, 64], sizes = [2, 32], strides = [1, 1]} : vector<2x128xf32> to vector<2x32xf32>
    %345 = math.tanh %344 : vector<2x32xf32>
    %346 = vector.extract_strided_slice %306 {offsets = [0, 96], sizes = [2, 32], strides = [1, 1]} : vector<2x128xf32> to vector<2x32xf32>
    %347 = arith.negf %346 : vector<2x32xf32>
    %348 = math.exp %347 : vector<2x32xf32>
    %cst_51 = arith.constant 1.000000e+00 : f32
    %349 = vector.broadcast %cst_51 : f32 to vector<2x32xf32>
    %350 = arith.addf %349, %348 : vector<2x32xf32>
    %351 = arith.divf %349, %350 : vector<2x32xf32>
    %352 = arith.mulf %343, %296 : vector<2x32xf32>
    %353 = arith.mulf %337, %345 : vector<2x32xf32>
    %354 = arith.addf %352, %353 : vector<2x32xf32>
    %355 = math.tanh %354 : vector<2x32xf32>
    %356 = arith.mulf %351, %355 : vector<2x32xf32>
    %357 = tpu.concatenate %331, %356 in 1 : vector<2x32xf32>, vector<2x32xf32> -> vector<2x64xf32>
    %cst_52 = arith.constant dense<0.000000e+00> : vector<2x256xf32>
    %358 = tpu.matmul %357, %2, %cst_52 {dimension_numbers = #tpu.dot_dimension_numbers<[1], [0], [0], [1], [0, 0, 1, 1], [], []>} : vector<2x64xf32>, vector<64x256xf32>, vector<2x256xf32> -> vector<2x256xf32>
    %359 = vector.extract_strided_slice %6 {offsets = [12, 0], sizes = [2, 128], strides = [1, 1]} : vector<16x256xf32> to vector<2x128xf32>
    %360 = vector.extract_strided_slice %358 {offsets = [0, 0], sizes = [2, 128], strides = [1, 1]} : vector<2x256xf32> to vector<2x128xf32>
    %361 = arith.addf %359, %360 : vector<2x128xf32>
    %362 = vector.extract_strided_slice %6 {offsets = [2, 128], sizes = [2, 128], strides = [1, 1]} : vector<16x256xf32> to vector<2x128xf32>
    %363 = vector.extract_strided_slice %358 {offsets = [0, 128], sizes = [2, 128], strides = [1, 1]} : vector<2x256xf32> to vector<2x128xf32>
    %364 = arith.addf %362, %363 : vector<2x128xf32>
    %365 = vector.extract_strided_slice %361 {offsets = [0, 0], sizes = [2, 32], strides = [1, 1]} : vector<2x128xf32> to vector<2x32xf32>
    %366 = arith.negf %365 : vector<2x32xf32>
    %367 = math.exp %366 : vector<2x32xf32>
    %cst_53 = arith.constant 1.000000e+00 : f32
    %368 = vector.broadcast %cst_53 : f32 to vector<2x32xf32>
    %369 = arith.addf %368, %367 : vector<2x32xf32>
    %370 = arith.divf %368, %369 : vector<2x32xf32>
    %371 = vector.extract_strided_slice %361 {offsets = [0, 32], sizes = [2, 32], strides = [1, 1]} : vector<2x128xf32> to vector<2x32xf32>
    %372 = arith.negf %371 : vector<2x32xf32>
    %373 = math.exp %372 : vector<2x32xf32>
    %cst_54 = arith.constant 1.000000e+00 : f32
    %374 = vector.broadcast %cst_54 : f32 to vector<2x32xf32>
    %375 = arith.addf %374, %373 : vector<2x32xf32>
    %376 = arith.divf %374, %375 : vector<2x32xf32>
    %377 = vector.extract_strided_slice %361 {offsets = [0, 64], sizes = [2, 32], strides = [1, 1]} : vector<2x128xf32> to vector<2x32xf32>
    %378 = math.tanh %377 : vector<2x32xf32>
    %379 = vector.extract_strided_slice %361 {offsets = [0, 96], sizes = [2, 32], strides = [1, 1]} : vector<2x128xf32> to vector<2x32xf32>
    %380 = arith.negf %379 : vector<2x32xf32>
    %381 = math.exp %380 : vector<2x32xf32>
    %cst_55 = arith.constant 1.000000e+00 : f32
    %382 = vector.broadcast %cst_55 : f32 to vector<2x32xf32>
    %383 = arith.addf %382, %381 : vector<2x32xf32>
    %384 = arith.divf %382, %383 : vector<2x32xf32>
    %385 = arith.mulf %376, %329 : vector<2x32xf32>
    %386 = arith.mulf %370, %378 : vector<2x32xf32>
    %387 = arith.addf %385, %386 : vector<2x32xf32>
    %388 = math.tanh %387 : vector<2x32xf32>
    %389 = arith.mulf %384, %388 : vector<2x32xf32>
    %390 = vector.extract_strided_slice %364 {offsets = [0, 0], sizes = [2, 32], strides = [1, 1]} : vector<2x128xf32> to vector<2x32xf32>
    %391 = arith.negf %390 : vector<2x32xf32>
    %392 = math.exp %391 : vector<2x32xf32>
    %cst_56 = arith.constant 1.000000e+00 : f32
    %393 = vector.broadcast %cst_56 : f32 to vector<2x32xf32>
    %394 = arith.addf %393, %392 : vector<2x32xf32>
    %395 = arith.divf %393, %394 : vector<2x32xf32>
    %396 = vector.extract_strided_slice %364 {offsets = [0, 32], sizes = [2, 32], strides = [1, 1]} : vector<2x128xf32> to vector<2x32xf32>
    %397 = arith.negf %396 : vector<2x32xf32>
    %398 = math.exp %397 : vector<2x32xf32>
    %cst_57 = arith.constant 1.000000e+00 : f32
    %399 = vector.broadcast %cst_57 : f32 to vector<2x32xf32>
    %400 = arith.addf %399, %398 : vector<2x32xf32>
    %401 = arith.divf %399, %400 : vector<2x32xf32>
    %402 = vector.extract_strided_slice %364 {offsets = [0, 64], sizes = [2, 32], strides = [1, 1]} : vector<2x128xf32> to vector<2x32xf32>
    %403 = math.tanh %402 : vector<2x32xf32>
    %404 = vector.extract_strided_slice %364 {offsets = [0, 96], sizes = [2, 32], strides = [1, 1]} : vector<2x128xf32> to vector<2x32xf32>
    %405 = arith.negf %404 : vector<2x32xf32>
    %406 = math.exp %405 : vector<2x32xf32>
    %cst_58 = arith.constant 1.000000e+00 : f32
    %407 = vector.broadcast %cst_58 : f32 to vector<2x32xf32>
    %408 = arith.addf %407, %406 : vector<2x32xf32>
    %409 = arith.divf %407, %408 : vector<2x32xf32>
    %410 = arith.mulf %401, %354 : vector<2x32xf32>
    %411 = arith.mulf %395, %403 : vector<2x32xf32>
    %412 = arith.addf %410, %411 : vector<2x32xf32>
    %413 = math.tanh %412 : vector<2x32xf32>
    %414 = arith.mulf %409, %413 : vector<2x32xf32>
    %415 = tpu.concatenate %389, %414 in 1 : vector<2x32xf32>, vector<2x32xf32> -> vector<2x64xf32>
    %cst_59 = arith.constant dense<0.000000e+00> : vector<2x256xf32>
    %416 = tpu.matmul %415, %2, %cst_59 {dimension_numbers = #tpu.dot_dimension_numbers<[1], [0], [0], [1], [0, 0, 1, 1], [], []>} : vector<2x64xf32>, vector<64x256xf32>, vector<2x256xf32> -> vector<2x256xf32>
    %417 = vector.extract_strided_slice %6 {offsets = [14, 0], sizes = [2, 128], strides = [1, 1]} : vector<16x256xf32> to vector<2x128xf32>
    %418 = vector.extract_strided_slice %416 {offsets = [0, 0], sizes = [2, 128], strides = [1, 1]} : vector<2x256xf32> to vector<2x128xf32>
    %419 = arith.addf %417, %418 : vector<2x128xf32>
    %420 = vector.extract_strided_slice %6 {offsets = [0, 128], sizes = [2, 128], strides = [1, 1]} : vector<16x256xf32> to vector<2x128xf32>
    %421 = vector.extract_strided_slice %416 {offsets = [0, 128], sizes = [2, 128], strides = [1, 1]} : vector<2x256xf32> to vector<2x128xf32>
    %422 = arith.addf %420, %421 : vector<2x128xf32>
    %423 = vector.extract_strided_slice %419 {offsets = [0, 0], sizes = [2, 32], strides = [1, 1]} : vector<2x128xf32> to vector<2x32xf32>
    %424 = arith.negf %423 : vector<2x32xf32>
    %425 = math.exp %424 : vector<2x32xf32>
    %cst_60 = arith.constant 1.000000e+00 : f32
    %426 = vector.broadcast %cst_60 : f32 to vector<2x32xf32>
    %427 = arith.addf %426, %425 : vector<2x32xf32>
    %428 = arith.divf %426, %427 : vector<2x32xf32>
    %429 = vector.extract_strided_slice %419 {offsets = [0, 32], sizes = [2, 32], strides = [1, 1]} : vector<2x128xf32> to vector<2x32xf32>
    %430 = arith.negf %429 : vector<2x32xf32>
    %431 = math.exp %430 : vector<2x32xf32>
    %cst_61 = arith.constant 1.000000e+00 : f32
    %432 = vector.broadcast %cst_61 : f32 to vector<2x32xf32>
    %433 = arith.addf %432, %431 : vector<2x32xf32>
    %434 = arith.divf %432, %433 : vector<2x32xf32>
    %435 = vector.extract_strided_slice %419 {offsets = [0, 64], sizes = [2, 32], strides = [1, 1]} : vector<2x128xf32> to vector<2x32xf32>
    %436 = math.tanh %435 : vector<2x32xf32>
    %437 = vector.extract_strided_slice %419 {offsets = [0, 96], sizes = [2, 32], strides = [1, 1]} : vector<2x128xf32> to vector<2x32xf32>
    %438 = arith.negf %437 : vector<2x32xf32>
    %439 = math.exp %438 : vector<2x32xf32>
    %cst_62 = arith.constant 1.000000e+00 : f32
    %440 = vector.broadcast %cst_62 : f32 to vector<2x32xf32>
    %441 = arith.addf %440, %439 : vector<2x32xf32>
    %442 = arith.divf %440, %441 : vector<2x32xf32>
    %443 = arith.mulf %434, %387 : vector<2x32xf32>
    %444 = arith.mulf %428, %436 : vector<2x32xf32>
    %445 = arith.addf %443, %444 : vector<2x32xf32>
    %446 = math.tanh %445 : vector<2x32xf32>
    %447 = arith.mulf %442, %446 : vector<2x32xf32>
    %448 = vector.extract_strided_slice %422 {offsets = [0, 0], sizes = [2, 32], strides = [1, 1]} : vector<2x128xf32> to vector<2x32xf32>
    %449 = arith.negf %448 : vector<2x32xf32>
    %450 = math.exp %449 : vector<2x32xf32>
    %cst_63 = arith.constant 1.000000e+00 : f32
    %451 = vector.broadcast %cst_63 : f32 to vector<2x32xf32>
    %452 = arith.addf %451, %450 : vector<2x32xf32>
    %453 = arith.divf %451, %452 : vector<2x32xf32>
    %454 = vector.extract_strided_slice %422 {offsets = [0, 32], sizes = [2, 32], strides = [1, 1]} : vector<2x128xf32> to vector<2x32xf32>
    %455 = arith.negf %454 : vector<2x32xf32>
    %456 = math.exp %455 : vector<2x32xf32>
    %cst_64 = arith.constant 1.000000e+00 : f32
    %457 = vector.broadcast %cst_64 : f32 to vector<2x32xf32>
    %458 = arith.addf %457, %456 : vector<2x32xf32>
    %459 = arith.divf %457, %458 : vector<2x32xf32>
    %460 = vector.extract_strided_slice %422 {offsets = [0, 64], sizes = [2, 32], strides = [1, 1]} : vector<2x128xf32> to vector<2x32xf32>
    %461 = math.tanh %460 : vector<2x32xf32>
    %462 = vector.extract_strided_slice %422 {offsets = [0, 96], sizes = [2, 32], strides = [1, 1]} : vector<2x128xf32> to vector<2x32xf32>
    %463 = arith.negf %462 : vector<2x32xf32>
    %464 = math.exp %463 : vector<2x32xf32>
    %cst_65 = arith.constant 1.000000e+00 : f32
    %465 = vector.broadcast %cst_65 : f32 to vector<2x32xf32>
    %466 = arith.addf %465, %464 : vector<2x32xf32>
    %467 = arith.divf %465, %466 : vector<2x32xf32>
    %468 = arith.mulf %459, %412 : vector<2x32xf32>
    %469 = arith.mulf %453, %461 : vector<2x32xf32>
    %470 = arith.addf %468, %469 : vector<2x32xf32>
    %471 = math.tanh %470 : vector<2x32xf32>
    %472 = arith.mulf %467, %471 : vector<2x32xf32>
    %473 = tpu.concatenate %41, %472, %99, %414, %157, %356, %215, %298, %273, %240, %331, %182, %389, %124, %447, %66 in 1 : vector<2x32xf32>, vector<2x32xf32>, vector<2x32xf32>, vector<2x32xf32>, vector<2x32xf32>, vector<2x32xf32>, vector<2x32xf32>, vector<2x32xf32>, vector<2x32xf32>, vector<2x32xf32>, vector<2x32xf32>, vector<2x32xf32>, vector<2x32xf32>, vector<2x32xf32>, vector<2x32xf32>, vector<2x32xf32> -> vector<2x512xf32>
    %c0_66 = arith.constant 0 : index
    %c0_67 = arith.constant 0 : index
    %474 = vector.load %arg5[%c0_66, %c0_67] : memref<2x512xf32, #tpu.memory_space<vmem>>, vector<2x512xf32>
    tpu.vector_store %arg5[%c0_66, %c0_67], %473 {strides = array<i32>} : memref<2x512xf32, #tpu.memory_space<vmem>>, vector<2x512xf32>,
    return
  }
  func.func @transform_0(%arg0: i32) -> (i32, i32) {
    %c0_i32 = arith.constant 0 : i32
    %c0_i32_0 = arith.constant 0 : i32
    %c0_i32_1 = arith.constant 0 : i32
    return %c0_i32, %c0_i32_0 : i32, i32
  }
  func.func @transform_1(%arg0: i32) -> (i32, i32) {
    %c0_i32 = arith.constant 0 : i32
    %c0_i32_0 = arith.constant 0 : i32
    %c0_i32_1 = arith.constant 0 : i32
    return %c0_i32, %c0_i32_0 : i32, i32
  }
  func.func @transform_2(%arg0: i32) -> (i32, i32) {
    %c0_i32 = arith.constant 0 : i32
    %c0_i32_0 = arith.constant 0 : i32
    %c0_i32_1 = arith.constant 0 : i32
    return %c0_i32, %c0_i32_0 : i32, i32
  }
  func.func @transform_3(%arg0: i32) -> (i32, i32) {
    %c0_i32 = arith.constant 0 : i32
    %c0_i32_0 = arith.constant 0 : i32
    %c0_i32_1 = arith.constant 0 : i32
    return %c0_i32, %c0_i32_0 : i32, i32
  }
  func.func @transform_4(%arg0: i32) -> (i32, i32) {
    %c0_i32 = arith.constant 0 : i32
    %c0_i32_0 = arith.constant 0 : i32
    %c0_i32_1 = arith.constant 0 : i32
    return %c0_i32, %c0_i32_0 : i32, i32
  }
}

</mosaic_0001>

<llo_original>
// kernel: dependency_parser_forward.3
$region0: #{dependency_parser_forward.3}
  #allocation0 [shape = 'u32[]', space=smem, size = 0x4, offset = 0x4, fixed_abs, tag = 'smem constant byte address 0x4 - core index']
  #allocation1 [shape = 'u32[72,128]{1,0:T(1,128)}', space=vmem, size = 0x9000, scoped, tag = 'internal scratch']
  %s0 = inlined_call_operand.vmem [shape: f32[2,8,128], index: 0, kind: input, shape index: {}]
  %s1 = inlined_call_operand.hbm [shape: f32[128,768], index: 1, kind: input, shape index: {}]
  %s2 = inlined_call_operand.vmem [shape: f32[2,6,8,128], index: 2, kind: output, shape index: {}]
  %s3 = sld [smem:[#allocation0]]
  $region22: #{dependency_parser_forward.3} parent=0
    _
  %s5 = ssub.s32 1, %s3
  %s6 = scalar_select 0, %s5, %s3
  $region1: #{dependency_parser_forward.3} parent=0
    #allocation2 [shape = 'u8[393216]{0}', space=vmem, size = 0x60000, scoped, tag = 'input window, operand 1, single buffered']
    #allocation3 [shape = 's32[1]{0}', space=sflag, size = 0x4, scoped, tag = 'scoped memory for dependency_parser_forward.3']
    %7 = vsyncpa [#allocation3], 0
    // Predicated region
    $region2: #{dependency_parser_forward.3} parent=1 // pred_check
      _
    $region3: #{dependency_parser_forward.3} parent=1 // pred_check_branch
      %9 = sbr.rel (0) target = $region5
    $region4: #{dependency_parser_forward.3} parent=1 // pred_region
      _
    $region5: #{dependency_parser_forward.3} parent=1 // pred_fallthru
      _
    // Predicated region
    $region6: #{dependency_parser_forward.3} parent=1 // pred_check
      _
    $region7: #{dependency_parser_forward.3} parent=1 // pred_check_branch
      %11 = sbr.rel (0) target = $region9
    $region8: #{dependency_parser_forward.3} parent=1 // pred_region
      %13 = vsyncadd [#allocation3], 0
      %s14 = sshll.u32 %s1, 4
      %s15 = int_to_ptr.hbm [resolvable:$true] %s14
      %s16 = sshll.u32 [#allocation2], 4
      %s17 = int_to_ptr.vmem [resolvable:$true] %s16
      %22 = dma.hbm_to_vmem [thread:$0]  %s15, 12288, %s17, [#allocation3], 768, 768, 48
    $region9: #{dependency_parser_forward.3} parent=1 // pred_fallthru
      _
    // Predicated region
    $region10: #{dependency_parser_forward.3} parent=1 // pred_check
      _
    $region11: #{dependency_parser_forward.3} parent=1 // pred_check_branch
      %24 = sbr.rel (0) target = $region13
    $region12: #{dependency_parser_forward.3} parent=1 // pred_region
      %26 = dma.done [#allocation3], 12288
    $region13: #{dependency_parser_forward.3} parent=1 // pred_fallthru
      _
    %v27 = vld [vmem:[%s0] sm:$0xff]
    %v28 = vld [vmem:[%s0 + $0x8] sm:$0xff]
    %v29 = vld [vmem:[#allocation2] sm:$0xff]
    %v30 = vld [vmem:[#allocation2 + $0x8] sm:$0xff]
    %v31 = vld [vmem:[#allocation2 + $0x10] sm:$0xff]
    %v32 = vld [vmem:[#allocation2 + $0x18] sm:$0xff]
    %v33 = vld [vmem:[#allocation2 + $0x20] sm:$0xff]
    %v34 = vld [vmem:[#allocation2 + $0x28] sm:$0xff]
    %v35 = vld [vmem:[#allocation2 + $0x30] sm:$0xff]
    %v36 = vld [vmem:[#allocation2 + $0x38] sm:$0xff]
    %v37 = vld [vmem:[#allocation2 + $0x40] sm:$0xff]
    %v38 = vld [vmem:[#allocation2 + $0x48] sm:$0xff]
    %v39 = vld [vmem:[#allocation2 + $0x50] sm:$0xff]
    %v40 = vld [vmem:[#allocation2 + $0x58] sm:$0xff]
    %v41 = vld [vmem:[#allocation2 + $0x60] sm:$0xff]
    %v42 = vld [vmem:[#allocation2 + $0x68] sm:$0xff]
    %v43 = vld [vmem:[#allocation2 + $0x70] sm:$0xff]
    %v44 = vld [vmem:[#allocation2 + $0x78] sm:$0xff]
    %v45 = vld [vmem:[#allocation2 + $0x80] sm:$0xff]
    %v46 = vld [vmem:[#allocation2 + $0x88] sm:$0xff]
    %v47 = vld [vmem:[#allocation2 + $0x90] sm:$0xff]
    %v48 = vld [vmem:[#allocation2 + $0x98] sm:$0xff]
    %v49 = vld [vmem:[#allocation2 + $0xa0] sm:$0xff]
    %v50 = vld [vmem:[#allocation2 + $0xa8] sm:$0xff]
    %v51 = vld [vmem:[#allocation2 + $0xb0] sm:$0xff]
    %v52 = vld [vmem:[#allocation2 + $0xb8] sm:$0xff]
    %v53 = vld [vmem:[#allocation2 + $0xc0] sm:$0xff]
    %v54 = vld [vmem:[#allocation2 + $0xc8] sm:$0xff]
    %v55 = vld [vmem:[#allocation2 + $0xd0] sm:$0xff]
    %v56 = vld [vmem:[#allocation2 + $0xd8] sm:$0xff]
    %v57 = vld [vmem:[#allocation2 + $0xe0] sm:$0xff]
    %v58 = vld [vmem:[#allocation2 + $0xe8] sm:$0xff]
    %v59 = vld [vmem:[#allocation2 + $0xf0] sm:$0xff]
    %v60 = vld [vmem:[#allocation2 + $0xf8] sm:$0xff]
    %v61 = vld [vmem:[#allocation2 + $0x100] sm:$0xff]
    %v62 = vld [vmem:[#allocation2 + $0x108] sm:$0xff]
    %v63 = vld [vmem:[#allocation2 + $0x110] sm:$0xff]
    %v64 = vld [vmem:[#allocation2 + $0x118] sm:$0xff]
    %v65 = vld [vmem:[#allocation2 + $0x120] sm:$0xff]
    %v66 = vld [vmem:[#allocation2 + $0x128] sm:$0xff]
    %v67 = vld [vmem:[#allocation2 + $0x130] sm:$0xff]
    %v68 = vld [vmem:[#allocation2 + $0x138] sm:$0xff]
    %v69 = vld [vmem:[#allocation2 + $0x140] sm:$0xff]
    %v70 = vld [vmem:[#allocation2 + $0x148] sm:$0xff]
    %v71 = vld [vmem:[#allocation2 + $0x150] sm:$0xff]
    %v72 = vld [vmem:[#allocation2 + $0x158] sm:$0xff]
    %v73 = vld [vmem:[#allocation2 + $0x160] sm:$0xff]
    %v74 = vld [vmem:[#allocation2 + $0x168] sm:$0xff]
    %v75 = vld [vmem:[#allocation2 + $0x170] sm:$0xff]
    %v76 = vld [vmem:[#allocation2 + $0x178] sm:$0xff]
    %v77 = vld [vmem:[#allocation2 + $0x180] sm:$0xff]
    %v78 = vld [vmem:[#allocation2 + $0x188] sm:$0xff]
    %v79 = vld [vmem:[#allocation2 + $0x190] sm:$0xff]
    %v80 = vld [vmem:[#allocation2 + $0x198] sm:$0xff]
    %v81 = vld [vmem:[#allocation2 + $0x1a0] sm:$0xff]
    %v82 = vld [vmem:[#allocation2 + $0x1a8] sm:$0xff]
    %v83 = vld [vmem:[#allocation2 + $0x1b0] sm:$0xff]
    %v84 = vld [vmem:[#allocation2 + $0x1b8] sm:$0xff]
    %v85 = vld [vmem:[#allocation2 + $0x1c0] sm:$0xff]
    %v86 = vld [vmem:[#allocation2 + $0x1c8] sm:$0xff]
    %v87 = vld [vmem:[#allocation2 + $0x1d0] sm:$0xff]
    %v88 = vld [vmem:[#allocation2 + $0x1d8] sm:$0xff]
    %v89 = vld [vmem:[#allocation2 + $0x1e0] sm:$0xff]
    %v90 = vld [vmem:[#allocation2 + $0x1e8] sm:$0xff]
    %v91 = vld [vmem:[#allocation2 + $0x1f0] sm:$0xff]
    %v92 = vld [vmem:[#allocation2 + $0x1f8] sm:$0xff]
    %v93 = vld [vmem:[#allocation2 + $0x200] sm:$0xff]
    %v94 = vld [vmem:[#allocation2 + $0x208] sm:$0xff]
    %v95 = vld [vmem:[#allocation2 + $0x210] sm:$0xff]
    %v96 = vld [vmem:[#allocation2 + $0x218] sm:$0xff]
    %v97 = vld [vmem:[#allocation2 + $0x220] sm:$0xff]
    %v98 = vld [vmem:[#allocation2 + $0x228] sm:$0xff]
    %v99 = vld [vmem:[#allocation2 + $0x230] sm:$0xff]
    %v100 = vld [vmem:[#allocation2 + $0x238] sm:$0xff]
    %v101 = vld [vmem:[#allocation2 + $0x240] sm:$0xff]
    %v102 = vld [vmem:[#allocation2 + $0x248] sm:$0xff]
    %v103 = vld [vmem:[#allocation2 + $0x250] sm:$0xff]
    %v104 = vld [vmem:[#allocation2 + $0x258] sm:$0xff]
    %v105 = vld [vmem:[#allocation2 + $0x260] sm:$0xff]
    %v106 = vld [vmem:[#allocation2 + $0x268] sm:$0xff]
    %v107 = vld [vmem:[#allocation2 + $0x270] sm:$0xff]
    %v108 = vld [vmem:[#allocation2 + $0x278] sm:$0xff]
    %v109 = vld [vmem:[#allocation2 + $0x280] sm:$0xff]
    %v110 = vld [vmem:[#allocation2 + $0x288] sm:$0xff]
    %v111 = vld [vmem:[#allocation2 + $0x290] sm:$0xff]
    %v112 = vld [vmem:[#allocation2 + $0x298] sm:$0xff]
    %v113 = vld [vmem:[#allocation2 + $0x2a0] sm:$0xff]
    %v114 = vld [vmem:[#allocation2 + $0x2a8] sm:$0xff]
    %v115 = vld [vmem:[#allocation2 + $0x2b0] sm:$0xff]
    %v116 = vld [vmem:[#allocation2 + $0x2b8] sm:$0xff]
    %v117 = vld [vmem:[#allocation2 + $0x2c0] sm:$0xff]
    %v118 = vld [vmem:[#allocation2 + $0x2c8] sm:$0xff]
    %v119 = vld [vmem:[#allocation2 + $0x2d0] sm:$0xff]
    %v120 = vld [vmem:[#allocation2 + $0x2d8] sm:$0xff]
    %v121 = vld [vmem:[#allocation2 + $0x2e0] sm:$0xff]
    %v122 = vld [vmem:[#allocation2 + $0x2e8] sm:$0xff]
    %v123 = vld [vmem:[#allocation2 + $0x2f0] sm:$0xff]
    %v124 = vld [vmem:[#allocation2 + $0x2f8] sm:$0xff]
    %125 = vmatpush.msra.mxu0 %v119
    %126 = vmatpush.msra.mxu0 %v113
    %127 = vmatpush.msra.mxu0 %v107
    %128 = vmatpush.msra.mxu0 %v101
    %129 = vmatpush.msra.mxu0 %v95
    %130 = vmatpush.msra.mxu0 %v89
    %131 = vmatpush.msra.mxu0 %v83
    %132 = vmatpush.msra.mxu0 %v77
    %133 = vmatpush.msra.mxu0 %v71
    %134 = vmatpush.msra.mxu0 %v65
    %135 = vmatpush.msra.mxu0 %v59
    %136 = vmatpush.msra.mxu0 %v53
    %137 = vmatpush.msra.mxu0 %v47
    %138 = vmatpush.msra.mxu0 %v41
    %139 = vmatpush.msra.mxu0 %v35
    %140 = vmatpush.msra.mxu0 %v29
    %141 = vmatmul.f32.gmra.mxu0 %v27
    %v142 = vpop.f32.mrf.mxu0
    %v143 = vadd.f32 0.0, %v142
    %144 = vmatmul.f32.gmra.mxu0 %v28
    %v145 = vpop.f32.mrf.mxu0
    %v146 = vadd.f32 0.0, %v145
    %147 = vdwg.mxu0
    %148 = vmatpush.msra.mxu0 %v120
    %149 = vmatpush.msra.mxu0 %v114
    %150 = vmatpush.msra.mxu0 %v108
    %151 = vmatpush.msra.mxu0 %v102
    %152 = vmatpush.msra.mxu0 %v96
    %153 = vmatpush.msra.mxu0 %v90
    %154 = vmatpush.msra.mxu0 %v84
    %155 = vmatpush.msra.mxu0 %v78
    %156 = vmatpush.msra.mxu0 %v72
    %157 = vmatpush.msra.mxu0 %v66
    %158 = vmatpush.msra.mxu0 %v60
    %159 = vmatpush.msra.mxu0 %v54
    %160 = vmatpush.msra.mxu0 %v48
    %161 = vmatpush.msra.mxu0 %v42
    %162 = vmatpush.msra.mxu0 %v36
    %163 = vmatpush.msra.mxu0 %v30
    %164 = vmatmul.f32.gmra.mxu0 %v27
    %v165 = vpop.f32.mrf.mxu0
    %v166 = vadd.f32 0.0, %v165
    %167 = vmatmul.f32.gmra.mxu0 %v28
    %v168 = vpop.f32.mrf.mxu0
    %v169 = vadd.f32 0.0, %v168
    %170 = vdwg.mxu0
    %171 = vmatpush.msra.mxu0 %v121
    %172 = vmatpush.msra.mxu0 %v115
    %173 = vmatpush.msra.mxu0 %v109
    %174 = vmatpush.msra.mxu0 %v103
    %175 = vmatpush.msra.mxu0 %v97
    %176 = vmatpush.msra.mxu0 %v91
    %177 = vmatpush.msra.mxu0 %v85
    %178 = vmatpush.msra.mxu0 %v79
    %179 = vmatpush.msra.mxu0 %v73
    %180 = vmatpush.msra.mxu0 %v67
    %181 = vmatpush.msra.mxu0 %v61
    %182 = vmatpush.msra.mxu0 %v55
    %183 = vmatpush.msra.mxu0 %v49
    %184 = vmatpush.msra.mxu0 %v43
    %185 = vmatpush.msra.mxu0 %v37
    %186 = vmatpush.msra.mxu0 %v31
    %187 = vmatmul.f32.gmra.mxu0 %v27
    %v188 = vpop.f32.mrf.mxu0
    %v189 = vadd.f32 0.0, %v188
    %190 = vmatmul.f32.gmra.mxu0 %v28
    %v191 = vpop.f32.mrf.mxu0
    %v192 = vadd.f32 0.0, %v191
    %193 = vdwg.mxu0
    %194 = vmatpush.msra.mxu0 %v122
    %195 = vmatpush.msra.mxu0 %v116
    %196 = vmatpush.msra.mxu0 %v110
    %197 = vmatpush.msra.mxu0 %v104
    %198 = vmatpush.msra.mxu0 %v98
    %199 = vmatpush.msra.mxu0 %v92
    %200 = vmatpush.msra.mxu0 %v86
    %201 = vmatpush.msra.mxu0 %v80
    %202 = vmatpush.msra.mxu0 %v74
    %203 = vmatpush.msra.mxu0 %v68
    %204 = vmatpush.msra.mxu0 %v62
    %205 = vmatpush.msra.mxu0 %v56
    %206 = vmatpush.msra.mxu0 %v50
    %207 = vmatpush.msra.mxu0 %v44
    %208 = vmatpush.msra.mxu0 %v38
    %209 = vmatpush.msra.mxu0 %v32
    %210 = vmatmul.f32.gmra.mxu0 %v27
    %v211 = vpop.f32.mrf.mxu0
    %v212 = vadd.f32 0.0, %v211
    %213 = vmatmul.f32.gmra.mxu0 %v28
    %v214 = vpop.f32.mrf.mxu0
    %v215 = vadd.f32 0.0, %v214
    %216 = vdwg.mxu0
    %217 = vmatpush.msra.mxu0 %v123
    %218 = vmatpush.msra.mxu0 %v117
    %219 = vmatpush.msra.mxu0 %v111
    %220 = vmatpush.msra.mxu0 %v105
    %221 = vmatpush.msra.mxu0 %v99
    %222 = vmatpush.msra.mxu0 %v93
    %223 = vmatpush.msra.mxu0 %v87
    %224 = vmatpush.msra.mxu0 %v81
    %225 = vmatpush.msra.mxu0 %v75
    %226 = vmatpush.msra.mxu0 %v69
    %227 = vmatpush.msra.mxu0 %v63
    %228 = vmatpush.msra.mxu0 %v57
    %229 = vmatpush.msra.mxu0 %v51
    %230 = vmatpush.msra.mxu0 %v45
    %231 = vmatpush.msra.mxu0 %v39
    %232 = vmatpush.msra.mxu0 %v33
    %233 = vmatmul.f32.gmra.mxu0 %v27
    %v234 = vpop.f32.mrf.mxu0
    %v235 = vadd.f32 0.0, %v234
    %236 = vmatmul.f32.gmra.mxu0 %v28
    %v237 = vpop.f32.mrf.mxu0
    %v238 = vadd.f32 0.0, %v237
    %239 = vdwg.mxu0
    %240 = vmatpush.msra.mxu0 %v124
    %241 = vmatpush.msra.mxu0 %v118
    %242 = vmatpush.msra.mxu0 %v112
    %243 = vmatpush.msra.mxu0 %v106
    %244 = vmatpush.msra.mxu0 %v100
    %245 = vmatpush.msra.mxu0 %v94
    %246 = vmatpush.msra.mxu0 %v88
    %247 = vmatpush.msra.mxu0 %v82
    %248 = vmatpush.msra.mxu0 %v76
    %249 = vmatpush.msra.mxu0 %v70
    %250 = vmatpush.msra.mxu0 %v64
    %251 = vmatpush.msra.mxu0 %v58
    %252 = vmatpush.msra.mxu0 %v52
    %253 = vmatpush.msra.mxu0 %v46
    %254 = vmatpush.msra.mxu0 %v40
    %255 = vmatpush.msra.mxu0 %v34
    %256 = vmatmul.f32.gmra.mxu0 %v27
    %v257 = vpop.f32.mrf.mxu0
    %v258 = vadd.f32 0.0, %v257
    %259 = vmatmul.f32.gmra.mxu0 %v28
    %v260 = vpop.f32.mrf.mxu0
    %v261 = vadd.f32 0.0, %v260
    %262 = vdwg.mxu0
    %263 = vmatpush.xpose.msra.mxu0 0.0
    %264 = vmatpush.xpose.msra.mxu0 0.0
    %265 = vmatpush.xpose.msra.mxu0 0.0
    %266 = vmatpush.xpose.msra.mxu0 0.0
    %267 = vmatpush.xpose.msra.mxu0 0.0
    %268 = vmatpush.xpose.msra.mxu0 0.0
    %269 = vmatpush.xpose.msra.mxu0 0.0
    %270 = vmatpush.xpose.msra.mxu0 0.0
    %271 = vmatpush.xpose.msra.mxu0 0.0
    %272 = vmatpush.xpose.msra.mxu0 0.0
    %273 = vmatpush.xpose.msra.mxu0 0.0
    %274 = vmatpush.xpose.msra.mxu0 0.0
    %275 = vmatpush.xpose.msra.mxu0 0.0
    %276 = vmatpush.xpose.msra.mxu0 0.0
    %277 = vmatpush.xpose.msra.mxu0 0.0
    %278 = vmatpush.xpose.msra.mxu0 %v27
    %279 = vmatmul.f32.gmra.mxu0 %v143
    %v280 = vpop.f32.mrf.mxu0
    %v281 = vadd.f32 0.0, %v280
    %282 = vmatmul.f32.gmra.mxu0 %v166
    %v283 = vpop.f32.mrf.mxu0
    %v284 = vadd.f32 0.0, %v283
    %285 = vmatmul.f32.gmra.mxu0 %v189
    %v286 = vpop.f32.mrf.mxu0
    %v287 = vadd.f32 0.0, %v286
    %288 = vmatmul.f32.gmra.mxu0 %v212
    %v289 = vpop.f32.mrf.mxu0
    %v290 = vadd.f32 0.0, %v289
    %291 = vmatmul.f32.gmra.mxu0 %v235
    %v292 = vpop.f32.mrf.mxu0
    %v293 = vadd.f32 0.0, %v292
    %294 = vmatmul.f32.gmra.mxu0 %v258
    %v295 = vpop.f32.mrf.mxu0
    %v296 = vadd.f32 0.0, %v295
    %297 = vdwg.mxu0
    %298 = vmatpush.xpose.msra.mxu0 0.0
    %299 = vmatpush.xpose.msra.mxu0 0.0
    %300 = vmatpush.xpose.msra.mxu0 0.0
    %301 = vmatpush.xpose.msra.mxu0 0.0
    %302 = vmatpush.xpose.msra.mxu0 0.0
    %303 = vmatpush.xpose.msra.mxu0 0.0
    %304 = vmatpush.xpose.msra.mxu0 0.0
    %305 = vmatpush.xpose.msra.mxu0 0.0
    %306 = vmatpush.xpose.msra.mxu0 0.0
    %307 = vmatpush.xpose.msra.mxu0 0.0
    %308 = vmatpush.xpose.msra.mxu0 0.0
    %309 = vmatpush.xpose.msra.mxu0 0.0
    %310 = vmatpush.xpose.msra.mxu0 0.0
    %311 = vmatpush.xpose.msra.mxu0 0.0
    %312 = vmatpush.xpose.msra.mxu0 0.0
    %313 = vmatpush.xpose.msra.mxu0 %v28
    %314 = vmatmul.f32.gmra.mxu0 %v146
    %v315 = vpop.f32.mrf.mxu0
    %v316 = vadd.f32 0.0, %v315
    %317 = vmatmul.f32.gmra.mxu0 %v169
    %v318 = vpop.f32.mrf.mxu0
    %v319 = vadd.f32 0.0, %v318
    %320 = vmatmul.f32.gmra.mxu0 %v192
    %v321 = vpop.f32.mrf.mxu0
    %v322 = vadd.f32 0.0, %v321
    %323 = vmatmul.f32.gmra.mxu0 %v215
    %v324 = vpop.f32.mrf.mxu0
    %v325 = vadd.f32 0.0, %v324
    %326 = vmatmul.f32.gmra.mxu0 %v238
    %v327 = vpop.f32.mrf.mxu0
    %v328 = vadd.f32 0.0, %v327
    %329 = vmatmul.f32.gmra.mxu0 %v261
    %v330 = vpop.f32.mrf.mxu0
    %v331 = vadd.f32 0.0, %v330
    %332 = vdwg.mxu0
    %333 = vst [vmem:[%s2] sm:$0xff] %v281
    %334 = vst [vmem:[%s2 + $0x8] sm:$0xff] %v284
    %335 = vst [vmem:[%s2 + $0x10] sm:$0xff] %v287
    %336 = vst [vmem:[%s2 + $0x18] sm:$0xff] %v290
    %337 = vst [vmem:[%s2 + $0x20] sm:$0xff] %v293
    %338 = vst [vmem:[%s2 + $0x28] sm:$0xff] %v296
    %339 = vst [vmem:[%s2 + $0x30] sm:$0xff] %v316
    %340 = vst [vmem:[%s2 + $0x38] sm:$0xff] %v319
    %341 = vst [vmem:[%s2 + $0x40] sm:$0xff] %v322
    %342 = vst [vmem:[%s2 + $0x48] sm:$0xff] %v325
    %343 = vst [vmem:[%s2 + $0x50] sm:$0xff] %v328
    %344 = vst [vmem:[%s2 + $0x58] sm:$0xff] %v331
    // Predicated region
    $region14: #{dependency_parser_forward.3} parent=1 // pred_check
      _
    $region15: #{dependency_parser_forward.3} parent=1 // pred_check_branch
      %346 = sbr.rel (0) target = $region17
    $region16: #{dependency_parser_forward.3} parent=1 // pred_region
      _
    $region17: #{dependency_parser_forward.3} parent=1 // pred_fallthru
      _
    // Predicated region
    $region18: #{dependency_parser_forward.3} parent=1 // pred_check
      _
    $region19: #{dependency_parser_forward.3} parent=1 // pred_check_branch
      %348 = sbr.rel (0) target = $region21
    $region20: #{dependency_parser_forward.3} parent=1 // pred_region
      _
    $region21: #{dependency_parser_forward.3} parent=1 // pred_fallthru
      _
    %349 = vsyncpa [#allocation3], 1

// kernel: dependency_parser_forward.2
$region0: #{dependency_parser_forward.2}
  #allocation0 [shape = 'u32[]', space=smem, size = 0x4, offset = 0x4, fixed_abs, tag = 'smem constant byte address 0x4 - core index']
  #allocation1 [shape = 'u32[72,128]{1,0:T(1,128)}', space=vmem, size = 0x9000, scoped, tag = 'internal scratch']
  %s0 = inlined_call_operand.vmem [shape: f32[16,32], index: 0, kind: input, shape index: {}]
  %s1 = inlined_call_operand.vmem [shape: f32[32,256], index: 1, kind: input, shape index: {}]
  %s2 = inlined_call_operand.vmem [shape: f32[64,256], index: 2, kind: input, shape index: {}]
  %s3 = inlined_call_operand.vmem [shape: f32[1,256], index: 3, kind: input, shape index: {}]
  %s4 = inlined_call_operand.vmem [shape: f32[2,512], index: 4, kind: output, shape index: {}]
  %s5 = sld [smem:[#allocation0]]
  $region26: #{dependency_parser_forward.2} parent=0
    _
  %s7 = ssub.s32 1, %s5
  %s8 = scalar_select 0, %s7, %s5
  // Predicated region
  $region2: #{dependency_parser_forward.2} parent=0 // pred_check
    _
  $region3: #{dependency_parser_forward.2} parent=0 // pred_check_branch
    %10 = sbr.rel (0) target = $region5
  $region4: #{dependency_parser_forward.2} parent=0 // pred_region
    _
  $region5: #{dependency_parser_forward.2} parent=0 // pred_fallthru
    _
  // Predicated region
  $region6: #{dependency_parser_forward.2} parent=0 // pred_check
    _
  $region7: #{dependency_parser_forward.2} parent=0 // pred_check_branch
    %12 = sbr.rel (0) target = $region9
  $region8: #{dependency_parser_forward.2} parent=0 // pred_region
    _
  $region9: #{dependency_parser_forward.2} parent=0 // pred_fallthru
    _
  // Predicated region
  $region10: #{dependency_parser_forward.2} parent=0 // pred_check
    _
  $region11: #{dependency_parser_forward.2} parent=0 // pred_check_branch
    %14 = sbr.rel (0) target = $region13
  $region12: #{dependency_parser_forward.2} parent=0 // pred_region
    _
  $region13: #{dependency_parser_forward.2} parent=0 // pred_fallthru
    _
  // Predicated region
  $region14: #{dependency_parser_forward.2} parent=0 // pred_check
    _
  $region15: #{dependency_parser_forward.2} parent=0 // pred_check_branch
    %16 = sbr.rel (0) target = $region17
  $region16: #{dependency_parser_forward.2} parent=0 // pred_region
    _
  $region17: #{dependency_parser_forward.2} parent=0 // pred_fallthru
    _
  %v17 = vld [vmem:[%s0] sm:$0xff]
  %v18 = vld [vmem:[%s0 + $0x8] sm:$0xff]
  %v19 = vld [vmem:[%s1] sm:$0xff]
  %v20 = vld [vmem:[%s1 + $0x8] sm:$0xff]
  %v21 = vld [vmem:[%s1 + $0x10] sm:$0xff]
  %v22 = vld [vmem:[%s1 + $0x18] sm:$0xff]
  %v23 = vld [vmem:[%s1 + $0x20] sm:$0xff]
  %v24 = vld [vmem:[%s1 + $0x28] sm:$0xff]
  %v25 = vld [vmem:[%s1 + $0x30] sm:$0xff]
  %v26 = vld [vmem:[%s1 + $0x38] sm:$0xff]
  %v27 = vld [vmem:[%s2] sm:$0xff]
  %v28 = vld [vmem:[%s2 + $0x8] sm:$0xff]
  %v29 = vld [vmem:[%s2 + $0x10] sm:$0xff]
  %v30 = vld [vmem:[%s2 + $0x18] sm:$0xff]
  %v31 = vld [vmem:[%s2 + $0x20] sm:$0xff]
  %v32 = vld [vmem:[%s2 + $0x28] sm:$0xff]
  %v33 = vld [vmem:[%s2 + $0x30] sm:$0xff]
  %v34 = vld [vmem:[%s2 + $0x38] sm:$0xff]
  %v35 = vld [vmem:[%s2 + $0x40] sm:$0xff]
  %v36 = vld [vmem:[%s2 + $0x48] sm:$0xff]
  %v37 = vld [vmem:[%s2 + $0x50] sm:$0xff]
  %v38 = vld [vmem:[%s2 + $0x58] sm:$0xff]
  %v39 = vld [vmem:[%s2 + $0x60] sm:$0xff]
  %v40 = vld [vmem:[%s2 + $0x68] sm:$0xff]
  %v41 = vld [vmem:[%s2 + $0x70] sm:$0xff]
  %v42 = vld [vmem:[%s2 + $0x78] sm:$0xff]
  %v43 = vld [vmem:[%s3] sm:$0x3]
  %v45 = vperm.slane %v43, 0
  %v46 = vperm.slane %v43, 1
  %vm49 = vcmask 261120
  %v51 = vsel %vm49, %v17, 0
  %v54 = vsel %vm49, %v18, 0
  %56 = vmatpush.msra.mxu0 0.0
  %57 = vmatpush.msra.mxu0 0.0
  %58 = vmatpush.msra.mxu0 0.0
  %59 = vmatpush.msra.mxu0 0.0
  %60 = vmatpush.msra.mxu0 0.0
  %61 = vmatpush.msra.mxu0 0.0
  %62 = vmatpush.msra.mxu0 0.0
  %63 = vmatpush.msra.mxu0 0.0
  %64 = vmatpush.msra.mxu0 0.0
  %65 = vmatpush.msra.mxu0 0.0
  %66 = vmatpush.msra.mxu0 0.0
  %67 = vmatpush.msra.mxu0 0.0
  %68 = vmatpush.msra.mxu0 %v25
  %69 = vmatpush.msra.mxu0 %v23
  %70 = vmatpush.msra.mxu0 %v21
  %71 = vmatpush.msra.mxu0 %v19
  %72 = vmatmul.f32.gmra.mxu0 %v51
  %v73 = vpop.f32.mrf.mxu0
  %v74 = vadd.f32 %v45, %v73
  %75 = vmatmul.f32.gmra.mxu0 %v54
  %v76 = vpop.f32.mrf.mxu0
  %v77 = vadd.f32 %v45, %v76
  %78 = vdwg.mxu0
  %79 = vmatpush.msra.mxu0 0.0
  %80 = vmatpush.msra.mxu0 0.0
  %81 = vmatpush.msra.mxu0 0.0
  %82 = vmatpush.msra.mxu0 0.0
  %83 = vmatpush.msra.mxu0 0.0
  %84 = vmatpush.msra.mxu0 0.0
  %85 = vmatpush.msra.mxu0 0.0
  %86 = vmatpush.msra.mxu0 0.0
  %87 = vmatpush.msra.mxu0 0.0
  %88 = vmatpush.msra.mxu0 0.0
  %89 = vmatpush.msra.mxu0 0.0
  %90 = vmatpush.msra.mxu0 0.0
  %91 = vmatpush.msra.mxu0 %v26
  %92 = vmatpush.msra.mxu0 %v24
  %93 = vmatpush.msra.mxu0 %v22
  %94 = vmatpush.msra.mxu0 %v20
  %95 = vmatmul.f32.gmra.mxu0 %v51
  %v96 = vpop.f32.mrf.mxu0
  %v97 = vadd.f32 %v46, %v96
  %98 = vmatmul.f32.gmra.mxu0 %v54
  %v99 = vpop.f32.mrf.mxu0
  %v100 = vadd.f32 %v46, %v99
  %101 = vdwg.mxu0
  %vm102 = vcmask 523264
  %v104 = vsel %vm102, 0.0, 0
  %106 = vmatpush.msra.mxu0 0.0
  %107 = vmatpush.msra.mxu0 0.0
  %108 = vmatpush.msra.mxu0 0.0
  %109 = vmatpush.msra.mxu0 0.0
  %110 = vmatpush.msra.mxu0 0.0
  %111 = vmatpush.msra.mxu0 0.0
  %112 = vmatpush.msra.mxu0 0.0
  %113 = vmatpush.msra.mxu0 0.0
  %114 = vmatpush.msra.mxu0 %v41
  %115 = vmatpush.msra.mxu0 %v39
  %116 = vmatpush.msra.mxu0 %v37
  %117 = vmatpush.msra.mxu0 %v35
  %118 = vmatpush.msra.mxu0 %v33
  %119 = vmatpush.msra.mxu0 %v31
  %120 = vmatpush.msra.mxu0 %v29
  %121 = vmatpush.msra.mxu0 %v27
  %122 = vmatmul.f32.gmra.mxu0 %v104
  %v123 = vpop.f32.mrf.mxu0
  %v124 = vadd.f32 0.0, %v123
  %125 = vdwg.mxu0
  %126 = vmatpush.msra.mxu0 0.0
  %127 = vmatpush.msra.mxu0 0.0
  %128 = vmatpush.msra.mxu0 0.0
  %129 = vmatpush.msra.mxu0 0.0
  %130 = vmatpush.msra.mxu0 0.0
  %131 = vmatpush.msra.mxu0 0.0
  %132 = vmatpush.msra.mxu0 0.0
  %133 = vmatpush.msra.mxu0 0.0
  %134 = vmatpush.msra.mxu0 %v42
  %135 = vmatpush.msra.mxu0 %v40
  %136 = vmatpush.msra.mxu0 %v38
  %137 = vmatpush.msra.mxu0 %v36
  %138 = vmatpush.msra.mxu0 %v34
  %139 = vmatpush.msra.mxu0 %v32
  %140 = vmatpush.msra.mxu0 %v30
  %141 = vmatpush.msra.mxu0 %v28
  %142 = vmatmul.f32.gmra.mxu0 %v104
  %v143 = vpop.f32.mrf.mxu0
  %v144 = vadd.f32 0.0, %v143
  %145 = vdwg.mxu0
  %v146 = vadd.f32 %v74, %v124
  %v148 = vrot.slane %v144, 2
  %v150 = vadd.f32 %v100, %v148
  %v151 = vxor.u32 %v146, 2147483648
  %v152 = vmul.f32 %v151, 1.442695
  %v153 = vpow.pop %v152
  %v154 = vadd.f32 %v153, 1.0
  %v155 = vrcp.pop %v154
  %v156 = vmul.f32 %v154, %v155
  %v157 = vsub.f32 1.0, %v156
  %v158 = vmul.f32 %v155, %v157
  %v159 = vadd.f32 %v155, %v158
  %vm160 = vweird.f32 %v154
  %vm161 = vweird.f32 %v155
  %vm162 = vmor %vm160, %vm161
  %v163 = vsel %vm162, %v155, %v159
  %v164 = vand.u32 2147483647, %v154
  %vm165 = vcmp.eq.f32.partialorder %v164, 8.507059e+37
  %v166 = vand.u32 %v154, 2147483648
  %v167 = vor.u32 1.1754944e-38, %v166
  %v168 = vsel %vm165, %v167, %v163
  %v169 = vmul.f32 1.0, %v168
  %v170 = vtanh.pop %v146
  %v171 = vmul.f32 %v169, 0.0
  %173 = vrot.lane.b32.xlu0 %v170, 64
  %v174 = vpop.permute.xlu0 %173
  %v176 = vmul.f32 %v169, %v174
  %178 = vrot.lane.b32.xlu0 %v176, 32
  %v179 = vpop.permute.xlu0 %178
  %v181 = vadd.f32 %v171, %v179
  %v182 = vtanh.pop %v181
  %184 = vrot.lane.b32.xlu0 %v182, 64
  %v185 = vpop.permute.xlu0 %184
  %v187 = vmul.f32 %v169, %v185
  %v188 = vxor.u32 %v150, 2147483648
  %v189 = vmul.f32 %v188, 1.442695
  %v190 = vpow.pop %v189
  %v191 = vadd.f32 %v190, 1.0
  %v192 = vrcp.pop %v191
  %v193 = vmul.f32 %v191, %v192
  %v194 = vsub.f32 1.0, %v193
  %v195 = vmul.f32 %v192, %v194
  %v196 = vadd.f32 %v192, %v195
  %vm197 = vweird.f32 %v191
  %vm198 = vweird.f32 %v192
  %vm199 = vmor %vm197, %vm198
  %v200 = vsel %vm199, %v192, %v196
  %v201 = vand.u32 2147483647, %v191
  %vm202 = vcmp.eq.f32.partialorder %v201, 8.507059e+37
  %v203 = vand.u32 %v191, 2147483648
  %v204 = vor.u32 1.1754944e-38, %v203
  %v205 = vsel %vm202, %v204, %v200
  %v206 = vmul.f32 1.0, %v205
  %v207 = vtanh.pop %v150
  %v208 = vmul.f32 %v206, 0.0
  %210 = vrot.lane.b32.xlu0 %v207, 64
  %v211 = vpop.permute.xlu0 %210
  %v213 = vmul.f32 %v206, %v211
  %215 = vrot.lane.b32.xlu0 %v213, 32
  %v216 = vpop.permute.xlu0 %215
  %v218 = vadd.f32 %v208, %v216
  %v219 = vtanh.pop %v218
  %221 = vrot.lane.b32.xlu0 %v219, 64
  %v222 = vpop.permute.xlu0 %221
  %v224 = vmul.f32 %v206, %v222
  %226 = vrot.lane.b32.xlu0 %v187, 32
  %v227 = vpop.permute.xlu0 %226
  %v230 = vrot.slane %v224, 6
  %231 = vrot.lane.b32.xlu0 %v230, 64
  %v232 = vpop.permute.xlu0 %231
  %v234 = vsel %vm49, %v227, %v232
  %v236 = vsel %vm102, %v234, 0
  %238 = vmatpush.msra.mxu0 0.0
  %239 = vmatpush.msra.mxu0 0.0
  %240 = vmatpush.msra.mxu0 0.0
  %241 = vmatpush.msra.mxu0 0.0
  %242 = vmatpush.msra.mxu0 0.0
  %243 = vmatpush.msra.mxu0 0.0
  %244 = vmatpush.msra.mxu0 0.0
  %245 = vmatpush.msra.mxu0 0.0
  %246 = vmatpush.msra.mxu0 %v41
  %247 = vmatpush.msra.mxu0 %v39
  %248 = vmatpush.msra.mxu0 %v37
  %249 = vmatpush.msra.mxu0 %v35
  %250 = vmatpush.msra.mxu0 %v33
  %251 = vmatpush.msra.mxu0 %v31
  %252 = vmatpush.msra.mxu0 %v29
  %253 = vmatpush.msra.mxu0 %v27
  %254 = vmatmul.f32.gmra.mxu0 %v236
  %v255 = vpop.f32.mrf.mxu0
  %v256 = vadd.f32 0.0, %v255
  %257 = vdwg.mxu0
  %258 = vmatpush.msra.mxu0 0.0
  %259 = vmatpush.msra.mxu0 0.0
  %260 = vmatpush.msra.mxu0 0.0
  %261 = vmatpush.msra.mxu0 0.0
  %262 = vmatpush.msra.mxu0 0.0
  %263 = vmatpush.msra.mxu0 0.0
  %264 = vmatpush.msra.mxu0 0.0
  %265 = vmatpush.msra.mxu0 0.0
  %266 = vmatpush.msra.mxu0 %v42
  %267 = vmatpush.msra.mxu0 %v40
  %268 = vmatpush.msra.mxu0 %v38
  %269 = vmatpush.msra.mxu0 %v36
  %270 = vmatpush.msra.mxu0 %v34
  %271 = vmatpush.msra.mxu0 %v32
  %272 = vmatpush.msra.mxu0 %v30
  %273 = vmatpush.msra.mxu0 %v28
  %274 = vmatmul.f32.gmra.mxu0 %v236
  %v275 = vpop.f32.mrf.mxu0
  %v276 = vadd.f32 0.0, %v275
  %277 = vdwg.mxu0
  %v279 = vrot.slane %v256, 6
  %v281 = vadd.f32 %v74, %v279
  %v283 = vrot.slane %v276, 4
  %v285 = vadd.f32 %v100, %v283
  %v286 = vxor.u32 %v281, 2147483648
  %v287 = vmul.f32 %v286, 1.442695
  %v288 = vpow.pop %v287
  %v289 = vadd.f32 %v288, 1.0
  %v290 = vrcp.pop %v289
  %v291 = vmul.f32 %v289, %v290
  %v292 = vsub.f32 1.0, %v291
  %v293 = vmul.f32 %v290, %v292
  %v294 = vadd.f32 %v290, %v293
  %vm295 = vweird.f32 %v289
  %vm296 = vweird.f32 %v290
  %vm297 = vmor %vm295, %vm296
  %v298 = vsel %vm297, %v290, %v294
  %v299 = vand.u32 2147483647, %v289
  %vm300 = vcmp.eq.f32.partialorder %v299, 8.507059e+37
  %v301 = vand.u32 %v289, 2147483648
  %v302 = vor.u32 1.1754944e-38, %v301
  %v303 = vsel %vm300, %v302, %v298
  %v304 = vmul.f32 1.0, %v303
  %v305 = vtanh.pop %v281
  %v307 = vrot.slane %v181, 6
  %v309 = vmul.f32 %v304, %v307
  %311 = vrot.lane.b32.xlu0 %v305, 64
  %v312 = vpop.permute.xlu0 %311
  %v314 = vmul.f32 %v304, %v312
  %316 = vrot.lane.b32.xlu0 %v314, 32
  %v317 = vpop.permute.xlu0 %316
  %v319 = vadd.f32 %v309, %v317
  %v320 = vtanh.pop %v319
  %322 = vrot.lane.b32.xlu0 %v320, 64
  %v323 = vpop.permute.xlu0 %322
  %v325 = vmul.f32 %v304, %v323
  %v326 = vxor.u32 %v285, 2147483648
  %v327 = vmul.f32 %v326, 1.442695
  %v328 = vpow.pop %v327
  %v329 = vadd.f32 %v328, 1.0
  %v330 = vrcp.pop %v329
  %v331 = vmul.f32 %v329, %v330
  %v332 = vsub.f32 1.0, %v331
  %v333 = vmul.f32 %v330, %v332
  %v334 = vadd.f32 %v330, %v333
  %vm335 = vweird.f32 %v329
  %vm336 = vweird.f32 %v330
  %vm337 = vmor %vm335, %vm336
  %v338 = vsel %vm337, %v330, %v334
  %v339 = vand.u32 2147483647, %v329
  %vm340 = vcmp.eq.f32.partialorder %v339, 8.507059e+37
  %v341 = vand.u32 %v329, 2147483648
  %v342 = vor.u32 1.1754944e-38, %v341
  %v343 = vsel %vm340, %v342, %v338
  %v344 = vmul.f32 1.0, %v343
  %v345 = vtanh.pop %v285
  %v347 = vrot.slane %v218, 2
  %v349 = vmul.f32 %v344, %v347
  %351 = vrot.lane.b32.xlu0 %v345, 64
  %v352 = vpop.permute.xlu0 %351
  %v354 = vmul.f32 %v344, %v352
  %356 = vrot.lane.b32.xlu0 %v354, 32
  %v357 = vpop.permute.xlu0 %356
  %v359 = vadd.f32 %v349, %v357
  %v360 = vtanh.pop %v359
  %362 = vrot.lane.b32.xlu0 %v360, 64
  %v363 = vpop.permute.xlu0 %362
  %v365 = vmul.f32 %v344, %v363
  %367 = vrot.lane.b32.xlu0 %v325, 32
  %v368 = vpop.permute.xlu0 %367
  %v371 = vrot.slane %v365, 2
  %372 = vrot.lane.b32.xlu0 %v371, 64
  %v373 = vpop.permute.xlu0 %372
  %v375 = vsel %vm49, %v368, %v373
  %v377 = vrot.slane %v375, 2
  %v378 = vsel %vm102, %v377, 0
  %380 = vmatpush.msra.mxu0 0.0
  %381 = vmatpush.msra.mxu0 0.0
  %382 = vmatpush.msra.mxu0 0.0
  %383 = vmatpush.msra.mxu0 0.0
  %384 = vmatpush.msra.mxu0 0.0
  %385 = vmatpush.msra.mxu0 0.0
  %386 = vmatpush.msra.mxu0 0.0
  %387 = vmatpush.msra.mxu0 0.0
  %388 = vmatpush.msra.mxu0 %v41
  %389 = vmatpush.msra.mxu0 %v39
  %390 = vmatpush.msra.mxu0 %v37
  %391 = vmatpush.msra.mxu0 %v35
  %392 = vmatpush.msra.mxu0 %v33
  %393 = vmatpush.msra.mxu0 %v31
  %394 = vmatpush.msra.mxu0 %v29
  %395 = vmatpush.msra.mxu0 %v27
  %396 = vmatmul.f32.gmra.mxu0 %v378
  %v397 = vpop.f32.mrf.mxu0
  %v398 = vadd.f32 0.0, %v397
  %399 = vdwg.mxu0
  %400 = vmatpush.msra.mxu0 0.0
  %401 = vmatpush.msra.mxu0 0.0
  %402 = vmatpush.msra.mxu0 0.0
  %403 = vmatpush.msra.mxu0 0.0
  %404 = vmatpush.msra.mxu0 0.0
  %405 = vmatpush.msra.mxu0 0.0
  %406 = vmatpush.msra.mxu0 0.0
  %407 = vmatpush.msra.mxu0 0.0
  %408 = vmatpush.msra.mxu0 %v42
  %409 = vmatpush.msra.mxu0 %v40
  %410 = vmatpush.msra.mxu0 %v38
  %411 = vmatpush.msra.mxu0 %v36
  %412 = vmatpush.msra.mxu0 %v34
  %413 = vmatpush.msra.mxu0 %v32
  %414 = vmatpush.msra.mxu0 %v30
  %415 = vmatpush.msra.mxu0 %v28
  %416 = vmatmul.f32.gmra.mxu0 %v378
  %v417 = vpop.f32.mrf.mxu0
  %v418 = vadd.f32 0.0, %v417
  %419 = vdwg.mxu0
  %v421 = vrot.slane %v398, 4
  %v423 = vadd.f32 %v74, %v421
  %v425 = vrot.slane %v418, 6
  %v427 = vadd.f32 %v100, %v425
  %v428 = vxor.u32 %v423, 2147483648
  %v429 = vmul.f32 %v428, 1.442695
  %v430 = vpow.pop %v429
  %v431 = vadd.f32 %v430, 1.0
  %v432 = vrcp.pop %v431
  %v433 = vmul.f32 %v431, %v432
  %v434 = vsub.f32 1.0, %v433
  %v435 = vmul.f32 %v432, %v434
  %v436 = vadd.f32 %v432, %v435
  %vm437 = vweird.f32 %v431
  %vm438 = vweird.f32 %v432
  %vm439 = vmor %vm437, %vm438
  %v440 = vsel %vm439, %v432, %v436
  %v441 = vand.u32 2147483647, %v431
  %vm442 = vcmp.eq.f32.partialorder %v441, 8.507059e+37
  %v443 = vand.u32 %v431, 2147483648
  %v444 = vor.u32 1.1754944e-38, %v443
  %v445 = vsel %vm442, %v444, %v440
  %v446 = vmul.f32 1.0, %v445
  %v447 = vtanh.pop %v423
  %v449 = vrot.slane %v319, 6
  %v451 = vmul.f32 %v446, %v449
  %453 = vrot.lane.b32.xlu0 %v447, 64
  %v454 = vpop.permute.xlu0 %453
  %v456 = vmul.f32 %v446, %v454
  %458 = vrot.lane.b32.xlu0 %v456, 32
  %v459 = vpop.permute.xlu0 %458
  %v461 = vadd.f32 %v451, %v459
  %v462 = vtanh.pop %v461
  %464 = vrot.lane.b32.xlu0 %v462, 64
  %v465 = vpop.permute.xlu0 %464
  %v467 = vmul.f32 %v446, %v465
  %v468 = vxor.u32 %v427, 2147483648
  %v469 = vmul.f32 %v468, 1.442695
  %v470 = vpow.pop %v469
  %v471 = vadd.f32 %v470, 1.0
  %v472 = vrcp.pop %v471
  %v473 = vmul.f32 %v471, %v472
  %v474 = vsub.f32 1.0, %v473
  %v475 = vmul.f32 %v472, %v474
  %v476 = vadd.f32 %v472, %v475
  %vm477 = vweird.f32 %v471
  %vm478 = vweird.f32 %v472
  %vm479 = vmor %vm477, %vm478
  %v480 = vsel %vm479, %v472, %v476
  %v481 = vand.u32 2147483647, %v471
  %vm482 = vcmp.eq.f32.partialorder %v481, 8.507059e+37
  %v483 = vand.u32 %v471, 2147483648
  %v484 = vor.u32 1.1754944e-38, %v483
  %v485 = vsel %vm482, %v484, %v480
  %v486 = vmul.f32 1.0, %v485
  %v487 = vtanh.pop %v427
  %v489 = vrot.slane %v359, 2
  %v491 = vmul.f32 %v486, %v489
  %493 = vrot.lane.b32.xlu0 %v487, 64
  %v494 = vpop.permute.xlu0 %493
  %v496 = vmul.f32 %v486, %v494
  %498 = vrot.lane.b32.xlu0 %v496, 32
  %v499 = vpop.permute.xlu0 %498
  %v501 = vadd.f32 %v491, %v499
  %v502 = vtanh.pop %v501
  %504 = vrot.lane.b32.xlu0 %v502, 64
  %v505 = vpop.permute.xlu0 %504
  %v507 = vmul.f32 %v486, %v505
  %509 = vrot.lane.b32.xlu0 %v467, 32
  %v510 = vpop.permute.xlu0 %509
  %v513 = vrot.slane %v507, 6
  %514 = vrot.lane.b32.xlu0 %v513, 64
  %v515 = vpop.permute.xlu0 %514
  %v517 = vsel %vm49, %v510, %v515
  %v519 = vrot.slane %v517, 4
  %v520 = vsel %vm102, %v519, 0
  %522 = vmatpush.msra.mxu0 0.0
  %523 = vmatpush.msra.mxu0 0.0
  %524 = vmatpush.msra.mxu0 0.0
  %525 = vmatpush.msra.mxu0 0.0
  %526 = vmatpush.msra.mxu0 0.0
  %527 = vmatpush.msra.mxu0 0.0
  %528 = vmatpush.msra.mxu0 0.0
  %529 = vmatpush.msra.mxu0 0.0
  %530 = vmatpush.msra.mxu0 %v41
  %531 = vmatpush.msra.mxu0 %v39
  %532 = vmatpush.msra.mxu0 %v37
  %533 = vmatpush.msra.mxu0 %v35
  %534 = vmatpush.msra.mxu0 %v33
  %535 = vmatpush.msra.mxu0 %v31
  %536 = vmatpush.msra.mxu0 %v29
  %537 = vmatpush.msra.mxu0 %v27
  %538 = vmatmul.f32.gmra.mxu0 %v520
  %v539 = vpop.f32.mrf.mxu0
  %v540 = vadd.f32 0.0, %v539
  %541 = vdwg.mxu0
  %542 = vmatpush.msra.mxu0 0.0
  %543 = vmatpush.msra.mxu0 0.0
  %544 = vmatpush.msra.mxu0 0.0
  %545 = vmatpush.msra.mxu0 0.0
  %546 = vmatpush.msra.mxu0 0.0
  %547 = vmatpush.msra.mxu0 0.0
  %548 = vmatpush.msra.mxu0 0.0
  %549 = vmatpush.msra.mxu0 0.0
  %550 = vmatpush.msra.mxu0 %v42
  %551 = vmatpush.msra.mxu0 %v40
  %552 = vmatpush.msra.mxu0 %v38
  %553 = vmatpush.msra.mxu0 %v36
  %554 = vmatpush.msra.mxu0 %v34
  %555 = vmatpush.msra.mxu0 %v32
  %556 = vmatpush.msra.mxu0 %v30
  %557 = vmatpush.msra.mxu0 %v28
  %558 = vmatmul.f32.gmra.mxu0 %v520
  %v559 = vpop.f32.mrf.mxu0
  %v560 = vadd.f32 0.0, %v559
  %561 = vdwg.mxu0
  %v563 = vrot.slane %v540, 2
  %v565 = vadd.f32 %v74, %v563
  %v566 = vadd.f32 %v100, %v560
  %v567 = vxor.u32 %v565, 2147483648
  %v568 = vmul.f32 %v567, 1.442695
  %v569 = vpow.pop %v568
  %v570 = vadd.f32 %v569, 1.0
  %v571 = vrcp.pop %v570
  %v572 = vmul.f32 %v570, %v571
  %v573 = vsub.f32 1.0, %v572
  %v574 = vmul.f32 %v571, %v573
  %v575 = vadd.f32 %v571, %v574
  %vm576 = vweird.f32 %v570
  %vm577 = vweird.f32 %v571
  %vm578 = vmor %vm576, %vm577
  %v579 = vsel %vm578, %v571, %v575
  %v580 = vand.u32 2147483647, %v570
  %vm581 = vcmp.eq.f32.partialorder %v580, 8.507059e+37
  %v582 = vand.u32 %v570, 2147483648
  %v583 = vor.u32 1.1754944e-38, %v582
  %v584 = vsel %vm581, %v583, %v579
  %v585 = vmul.f32 1.0, %v584
  %v586 = vtanh.pop %v565
  %v588 = vrot.slane %v461, 6
  %v590 = vmul.f32 %v585, %v588
  %592 = vrot.lane.b32.xlu0 %v586, 64
  %v593 = vpop.permute.xlu0 %592
  %v595 = vmul.f32 %v585, %v593
  %597 = vrot.lane.b32.xlu0 %v595, 32
  %v598 = vpop.permute.xlu0 %597
  %v600 = vadd.f32 %v590, %v598
  %v601 = vtanh.pop %v600
  %603 = vrot.lane.b32.xlu0 %v601, 64
  %v604 = vpop.permute.xlu0 %603
  %v606 = vmul.f32 %v585, %v604
  %v607 = vxor.u32 %v566, 2147483648
  %v608 = vmul.f32 %v607, 1.442695
  %v609 = vpow.pop %v608
  %v610 = vadd.f32 %v609, 1.0
  %v611 = vrcp.pop %v610
  %v612 = vmul.f32 %v610, %v611
  %v613 = vsub.f32 1.0, %v612
  %v614 = vmul.f32 %v611, %v613
  %v615 = vadd.f32 %v611, %v614
  %vm616 = vweird.f32 %v610
  %vm617 = vweird.f32 %v611
  %vm618 = vmor %vm616, %vm617
  %v619 = vsel %vm618, %v611, %v615
  %v620 = vand.u32 2147483647, %v610
  %vm621 = vcmp.eq.f32.partialorder %v620, 8.507059e+37
  %v622 = vand.u32 %v610, 2147483648
  %v623 = vor.u32 1.1754944e-38, %v622
  %v624 = vsel %vm621, %v623, %v619
  %v625 = vmul.f32 1.0, %v624
  %v626 = vtanh.pop %v566
  %v628 = vrot.slane %v501, 2
  %v630 = vmul.f32 %v625, %v628
  %632 = vrot.lane.b32.xlu0 %v626, 64
  %v633 = vpop.permute.xlu0 %632
  %v635 = vmul.f32 %v625, %v633
  %637 = vrot.lane.b32.xlu0 %v635, 32
  %v638 = vpop.permute.xlu0 %637
  %v640 = vadd.f32 %v630, %v638
  %v641 = vtanh.pop %v640
  %643 = vrot.lane.b32.xlu0 %v641, 64
  %v644 = vpop.permute.xlu0 %643
  %v646 = vmul.f32 %v625, %v644
  %648 = vrot.lane.b32.xlu0 %v606, 32
  %v649 = vpop.permute.xlu0 %648
  %v652 = vrot.slane %v646, 2
  %653 = vrot.lane.b32.xlu0 %v652, 64
  %v654 = vpop.permute.xlu0 %653
  %v656 = vsel %vm49, %v649, %v654
  %v658 = vrot.slane %v656, 6
  %v659 = vsel %vm102, %v658, 0
  %661 = vmatpush.msra.mxu0 0.0
  %662 = vmatpush.msra.mxu0 0.0
  %663 = vmatpush.msra.mxu0 0.0
  %664 = vmatpush.msra.mxu0 0.0
  %665 = vmatpush.msra.mxu0 0.0
  %666 = vmatpush.msra.mxu0 0.0
  %667 = vmatpush.msra.mxu0 0.0
  %668 = vmatpush.msra.mxu0 0.0
  %669 = vmatpush.msra.mxu0 %v41
  %670 = vmatpush.msra.mxu0 %v39
  %671 = vmatpush.msra.mxu0 %v37
  %672 = vmatpush.msra.mxu0 %v35
  %673 = vmatpush.msra.mxu0 %v33
  %674 = vmatpush.msra.mxu0 %v31
  %675 = vmatpush.msra.mxu0 %v29
  %676 = vmatpush.msra.mxu0 %v27
  %677 = vmatmul.f32.gmra.mxu0 %v659
  %v678 = vpop.f32.mrf.mxu0
  %v679 = vadd.f32 0.0, %v678
  %680 = vdwg.mxu0
  %681 = vmatpush.msra.mxu0 0.0
  %682 = vmatpush.msra.mxu0 0.0
  %683 = vmatpush.msra.mxu0 0.0
  %684 = vmatpush.msra.mxu0 0.0
  %685 = vmatpush.msra.mxu0 0.0
  %686 = vmatpush.msra.mxu0 0.0
  %687 = vmatpush.msra.mxu0 0.0
  %688 = vmatpush.msra.mxu0 0.0
  %689 = vmatpush.msra.mxu0 %v42
  %690 = vmatpush.msra.mxu0 %v40
  %691 = vmatpush.msra.mxu0 %v38
  %692 = vmatpush.msra.mxu0 %v36
  %693 = vmatpush.msra.mxu0 %v34
  %694 = vmatpush.msra.mxu0 %v32
  %695 = vmatpush.msra.mxu0 %v30
  %696 = vmatpush.msra.mxu0 %v28
  %697 = vmatmul.f32.gmra.mxu0 %v659
  %v698 = vpop.f32.mrf.mxu0
  %v699 = vadd.f32 0.0, %v698
  %700 = vdwg.mxu0
  %v701 = vadd.f32 %v77, %v679
  %v703 = vrot.slane %v699, 2
  %v705 = vadd.f32 %v97, %v703
  %v706 = vxor.u32 %v701, 2147483648
  %v707 = vmul.f32 %v706, 1.442695
  %v708 = vpow.pop %v707
  %v709 = vadd.f32 %v708, 1.0
  %v710 = vrcp.pop %v709
  %v711 = vmul.f32 %v709, %v710
  %v712 = vsub.f32 1.0, %v711
  %v713 = vmul.f32 %v710, %v712
  %v714 = vadd.f32 %v710, %v713
  %vm715 = vweird.f32 %v709
  %vm716 = vweird.f32 %v710
  %vm717 = vmor %vm715, %vm716
  %v718 = vsel %vm717, %v710, %v714
  %v719 = vand.u32 2147483647, %v709
  %vm720 = vcmp.eq.f32.partialorder %v719, 8.507059e+37
  %v721 = vand.u32 %v709, 2147483648
  %v722 = vor.u32 1.1754944e-38, %v721
  %v723 = vsel %vm720, %v722, %v718
  %v724 = vmul.f32 1.0, %v723
  %v725 = vtanh.pop %v701
  %v727 = vrot.slane %v600, 6
  %v729 = vmul.f32 %v724, %v727
  %731 = vrot.lane.b32.xlu0 %v725, 64
  %v732 = vpop.permute.xlu0 %731
  %v734 = vmul.f32 %v724, %v732
  %736 = vrot.lane.b32.xlu0 %v734, 32
  %v737 = vpop.permute.xlu0 %736
  %v739 = vadd.f32 %v729, %v737
  %v740 = vtanh.pop %v739
  %742 = vrot.lane.b32.xlu0 %v740, 64
  %v743 = vpop.permute.xlu0 %742
  %v745 = vmul.f32 %v724, %v743
  %v746 = vxor.u32 %v705, 2147483648
  %v747 = vmul.f32 %v746, 1.442695
  %v748 = vpow.pop %v747
  %v749 = vadd.f32 %v748, 1.0
  %v750 = vrcp.pop %v749
  %v751 = vmul.f32 %v749, %v750
  %v752 = vsub.f32 1.0, %v751
  %v753 = vmul.f32 %v750, %v752
  %v754 = vadd.f32 %v750, %v753
  %vm755 = vweird.f32 %v749
  %vm756 = vweird.f32 %v750
  %vm757 = vmor %vm755, %vm756
  %v758 = vsel %vm757, %v750, %v754
  %v759 = vand.u32 2147483647, %v749
  %vm760 = vcmp.eq.f32.partialorder %v759, 8.507059e+37
  %v761 = vand.u32 %v749, 2147483648
  %v762 = vor.u32 1.1754944e-38, %v761
  %v763 = vsel %vm760, %v762, %v758
  %v764 = vmul.f32 1.0, %v763
  %v765 = vtanh.pop %v705
  %v767 = vrot.slane %v640, 2
  %v769 = vmul.f32 %v764, %v767
  %771 = vrot.lane.b32.xlu0 %v765, 64
  %v772 = vpop.permute.xlu0 %771
  %v774 = vmul.f32 %v764, %v772
  %776 = vrot.lane.b32.xlu0 %v774, 32
  %v777 = vpop.permute.xlu0 %776
  %v779 = vadd.f32 %v769, %v777
  %v780 = vtanh.pop %v779
  %782 = vrot.lane.b32.xlu0 %v780, 64
  %v783 = vpop.permute.xlu0 %782
  %v785 = vmul.f32 %v764, %v783
  %787 = vrot.lane.b32.xlu0 %v745, 32
  %v788 = vpop.permute.xlu0 %787
  %v791 = vrot.slane %v785, 6
  %792 = vrot.lane.b32.xlu0 %v791, 64
  %v793 = vpop.permute.xlu0 %792
  %v795 = vsel %vm49, %v788, %v793
  %v797 = vsel %vm102, %v795, 0
  %799 = vmatpush.msra.mxu0 0.0
  %800 = vmatpush.msra.mxu0 0.0
  %801 = vmatpush.msra.mxu0 0.0
  %802 = vmatpush.msra.mxu0 0.0
  %803 = vmatpush.msra.mxu0 0.0
  %804 = vmatpush.msra.mxu0 0.0
  %805 = vmatpush.msra.mxu0 0.0
  %806 = vmatpush.msra.mxu0 0.0
  %807 = vmatpush.msra.mxu0 %v41
  %808 = vmatpush.msra.mxu0 %v39
  %809 = vmatpush.msra.mxu0 %v37
  %810 = vmatpush.msra.mxu0 %v35
  %811 = vmatpush.msra.mxu0 %v33
  %812 = vmatpush.msra.mxu0 %v31
  %813 = vmatpush.msra.mxu0 %v29
  %814 = vmatpush.msra.mxu0 %v27
  %815 = vmatmul.f32.gmra.mxu0 %v797
  %v816 = vpop.f32.mrf.mxu0
  %v817 = vadd.f32 0.0, %v816
  %818 = vdwg.mxu0
  %819 = vmatpush.msra.mxu0 0.0
  %820 = vmatpush.msra.mxu0 0.0
  %821 = vmatpush.msra.mxu0 0.0
  %822 = vmatpush.msra.mxu0 0.0
  %823 = vmatpush.msra.mxu0 0.0
  %824 = vmatpush.msra.mxu0 0.0
  %825 = vmatpush.msra.mxu0 0.0
  %826 = vmatpush.msra.mxu0 0.0
  %827 = vmatpush.msra.mxu0 %v42
  %828 = vmatpush.msra.mxu0 %v40
  %829 = vmatpush.msra.mxu0 %v38
  %830 = vmatpush.msra.mxu0 %v36
  %831 = vmatpush.msra.mxu0 %v34
  %832 = vmatpush.msra.mxu0 %v32
  %833 = vmatpush.msra.mxu0 %v30
  %834 = vmatpush.msra.mxu0 %v28
  %835 = vmatmul.f32.gmra.mxu0 %v797
  %v836 = vpop.f32.mrf.mxu0
  %v837 = vadd.f32 0.0, %v836
  %838 = vdwg.mxu0
  %v840 = vrot.slane %v817, 6
  %v842 = vadd.f32 %v77, %v840
  %v844 = vrot.slane %v837, 4
  %v846 = vadd.f32 %v97, %v844
  %v847 = vxor.u32 %v842, 2147483648
  %v848 = vmul.f32 %v847, 1.442695
  %v849 = vpow.pop %v848
  %v850 = vadd.f32 %v849, 1.0
  %v851 = vrcp.pop %v850
  %v852 = vmul.f32 %v850, %v851
  %v853 = vsub.f32 1.0, %v852
  %v854 = vmul.f32 %v851, %v853
  %v855 = vadd.f32 %v851, %v854
  %vm856 = vweird.f32 %v850
  %vm857 = vweird.f32 %v851
  %vm858 = vmor %vm856, %vm857
  %v859 = vsel %vm858, %v851, %v855
  %v860 = vand.u32 2147483647, %v850
  %vm861 = vcmp.eq.f32.partialorder %v860, 8.507059e+37
  %v862 = vand.u32 %v850, 2147483648
  %v863 = vor.u32 1.1754944e-38, %v862
  %v864 = vsel %vm861, %v863, %v859
  %v865 = vmul.f32 1.0, %v864
  %v866 = vtanh.pop %v842
  %v868 = vrot.slane %v739, 6
  %v870 = vmul.f32 %v865, %v868
  %872 = vrot.lane.b32.xlu0 %v866, 64
  %v873 = vpop.permute.xlu0 %872
  %v875 = vmul.f32 %v865, %v873
  %877 = vrot.lane.b32.xlu0 %v875, 32
  %v878 = vpop.permute.xlu0 %877
  %v880 = vadd.f32 %v870, %v878
  %v881 = vtanh.pop %v880
  %883 = vrot.lane.b32.xlu0 %v881, 64
  %v884 = vpop.permute.xlu0 %883
  %v886 = vmul.f32 %v865, %v884
  %v887 = vxor.u32 %v846, 2147483648
  %v888 = vmul.f32 %v887, 1.442695
  %v889 = vpow.pop %v888
  %v890 = vadd.f32 %v889, 1.0
  %v891 = vrcp.pop %v890
  %v892 = vmul.f32 %v890, %v891
  %v893 = vsub.f32 1.0, %v892
  %v894 = vmul.f32 %v891, %v893
  %v895 = vadd.f32 %v891, %v894
  %vm896 = vweird.f32 %v890
  %vm897 = vweird.f32 %v891
  %vm898 = vmor %vm896, %vm897
  %v899 = vsel %vm898, %v891, %v895
  %v900 = vand.u32 2147483647, %v890
  %vm901 = vcmp.eq.f32.partialorder %v900, 8.507059e+37
  %v902 = vand.u32 %v890, 2147483648
  %v903 = vor.u32 1.1754944e-38, %v902
  %v904 = vsel %vm901, %v903, %v899
  %v905 = vmul.f32 1.0, %v904
  %v906 = vtanh.pop %v846
  %v908 = vrot.slane %v779, 2
  %v910 = vmul.f32 %v905, %v908
  %912 = vrot.lane.b32.xlu0 %v906, 64
  %v913 = vpop.permute.xlu0 %912
  %v915 = vmul.f32 %v905, %v913
  %917 = vrot.lane.b32.xlu0 %v915, 32
  %v918 = vpop.permute.xlu0 %917
  %v920 = vadd.f32 %v910, %v918
  %v921 = vtanh.pop %v920
  %923 = vrot.lane.b32.xlu0 %v921, 64
  %v924 = vpop.permute.xlu0 %923
  %v926 = vmul.f32 %v905, %v924
  %928 = vrot.lane.b32.xlu0 %v886, 32
  %v929 = vpop.permute.xlu0 %928
  %v932 = vrot.slane %v926, 2
  %933 = vrot.lane.b32.xlu0 %v932, 64
  %v934 = vpop.permute.xlu0 %933
  %v936 = vsel %vm49, %v929, %v934
  %v938 = vrot.slane %v936, 2
  %v939 = vsel %vm102, %v938, 0
  %941 = vmatpush.msra.mxu0 0.0
  %942 = vmatpush.msra.mxu0 0.0
  %943 = vmatpush.msra.mxu0 0.0
  %944 = vmatpush.msra.mxu0 0.0
  %945 = vmatpush.msra.mxu0 0.0
  %946 = vmatpush.msra.mxu0 0.0
  %947 = vmatpush.msra.mxu0 0.0
  %948 = vmatpush.msra.mxu0 0.0
  %949 = vmatpush.msra.mxu0 %v41
  %950 = vmatpush.msra.mxu0 %v39
  %951 = vmatpush.msra.mxu0 %v37
  %952 = vmatpush.msra.mxu0 %v35
  %953 = vmatpush.msra.mxu0 %v33
  %954 = vmatpush.msra.mxu0 %v31
  %955 = vmatpush.msra.mxu0 %v29
  %956 = vmatpush.msra.mxu0 %v27
  %957 = vmatmul.f32.gmra.mxu0 %v939
  %v958 = vpop.f32.mrf.mxu0
  %v959 = vadd.f32 0.0, %v958
  %960 = vdwg.mxu0
  %961 = vmatpush.msra.mxu0 0.0
  %962 = vmatpush.msra.mxu0 0.0
  %963 = vmatpush.msra.mxu0 0.0
  %964 = vmatpush.msra.mxu0 0.0
  %965 = vmatpush.msra.mxu0 0.0
  %966 = vmatpush.msra.mxu0 0.0
  %967 = vmatpush.msra.mxu0 0.0
  %968 = vmatpush.msra.mxu0 0.0
  %969 = vmatpush.msra.mxu0 %v42
  %970 = vmatpush.msra.mxu0 %v40
  %971 = vmatpush.msra.mxu0 %v38
  %972 = vmatpush.msra.mxu0 %v36
  %973 = vmatpush.msra.mxu0 %v34
  %974 = vmatpush.msra.mxu0 %v32
  %975 = vmatpush.msra.mxu0 %v30
  %976 = vmatpush.msra.mxu0 %v28
  %977 = vmatmul.f32.gmra.mxu0 %v939
  %v978 = vpop.f32.mrf.mxu0
  %v979 = vadd.f32 0.0, %v978
  %980 = vdwg.mxu0
  %v982 = vrot.slane %v959, 4
  %v984 = vadd.f32 %v77, %v982
  %v986 = vrot.slane %v979, 6
  %v988 = vadd.f32 %v97, %v986
  %v989 = vxor.u32 %v984, 2147483648
  %v990 = vmul.f32 %v989, 1.442695
  %v991 = vpow.pop %v990
  %v992 = vadd.f32 %v991, 1.0
  %v993 = vrcp.pop %v992
  %v994 = vmul.f32 %v992, %v993
  %v995 = vsub.f32 1.0, %v994
  %v996 = vmul.f32 %v993, %v995
  %v997 = vadd.f32 %v993, %v996
  %vm998 = vweird.f32 %v992
  %vm999 = vweird.f32 %v993
  %vm1000 = vmor %vm998, %vm999
  %v1001 = vsel %vm1000, %v993, %v997
  %v1002 = vand.u32 2147483647, %v992
  %vm1003 = vcmp.eq.f32.partialorder %v1002, 8.507059e+37
  %v1004 = vand.u32 %v992, 2147483648
  %v1005 = vor.u32 1.1754944e-38, %v1004
  %v1006 = vsel %vm1003, %v1005, %v1001
  %v1007 = vmul.f32 1.0, %v1006
  %v1008 = vtanh.pop %v984
  %v1010 = vrot.slane %v880, 6
  %v1012 = vmul.f32 %v1007, %v1010
  %1014 = vrot.lane.b32.xlu0 %v1008, 64
  %v1015 = vpop.permute.xlu0 %1014
  %v1017 = vmul.f32 %v1007, %v1015
  %1019 = vrot.lane.b32.xlu0 %v1017, 32
  %v1020 = vpop.permute.xlu0 %1019
  %v1022 = vadd.f32 %v1012, %v1020
  %v1023 = vtanh.pop %v1022
  %1025 = vrot.lane.b32.xlu0 %v1023, 64
  %v1026 = vpop.permute.xlu0 %1025
  %v1028 = vmul.f32 %v1007, %v1026
  %v1029 = vxor.u32 %v988, 2147483648
  %v1030 = vmul.f32 %v1029, 1.442695
  %v1031 = vpow.pop %v1030
  %v1032 = vadd.f32 %v1031, 1.0
  %v1033 = vrcp.pop %v1032
  %v1034 = vmul.f32 %v1032, %v1033
  %v1035 = vsub.f32 1.0, %v1034
  %v1036 = vmul.f32 %v1033, %v1035
  %v1037 = vadd.f32 %v1033, %v1036
  %vm1038 = vweird.f32 %v1032
  %vm1039 = vweird.f32 %v1033
  %vm1040 = vmor %vm1038, %vm1039
  %v1041 = vsel %vm1040, %v1033, %v1037
  %v1042 = vand.u32 2147483647, %v1032
  %vm1043 = vcmp.eq.f32.partialorder %v1042, 8.507059e+37
  %v1044 = vand.u32 %v1032, 2147483648
  %v1045 = vor.u32 1.1754944e-38, %v1044
  %v1046 = vsel %vm1043, %v1045, %v1041
  %v1047 = vmul.f32 1.0, %v1046
  %v1048 = vtanh.pop %v988
  %v1050 = vrot.slane %v920, 2
  %v1052 = vmul.f32 %v1047, %v1050
  %1054 = vrot.lane.b32.xlu0 %v1048, 64
  %v1055 = vpop.permute.xlu0 %1054
  %v1057 = vmul.f32 %v1047, %v1055
  %1059 = vrot.lane.b32.xlu0 %v1057, 32
  %v1060 = vpop.permute.xlu0 %1059
  %v1062 = vadd.f32 %v1052, %v1060
  %v1063 = vtanh.pop %v1062
  %1065 = vrot.lane.b32.xlu0 %v1063, 64
  %v1066 = vpop.permute.xlu0 %1065
  %v1068 = vmul.f32 %v1047, %v1066
  %1070 = vrot.lane.b32.xlu0 %v1028, 32
  %v1071 = vpop.permute.xlu0 %1070
  %v1074 = vrot.slane %v1068, 6
  %1075 = vrot.lane.b32.xlu0 %v1074, 64
  %v1076 = vpop.permute.xlu0 %1075
  %v1078 = vsel %vm49, %v1071, %v1076
  %v1080 = vrot.slane %v1078, 4
  %v1081 = vsel %vm102, %v1080, 0
  %1083 = vmatpush.msra.mxu0 0.0
  %1084 = vmatpush.msra.mxu0 0.0
  %1085 = vmatpush.msra.mxu0 0.0
  %1086 = vmatpush.msra.mxu0 0.0
  %1087 = vmatpush.msra.mxu0 0.0
  %1088 = vmatpush.msra.mxu0 0.0
  %1089 = vmatpush.msra.mxu0 0.0
  %1090 = vmatpush.msra.mxu0 0.0
  %1091 = vmatpush.msra.mxu0 %v41
  %1092 = vmatpush.msra.mxu0 %v39
  %1093 = vmatpush.msra.mxu0 %v37
  %1094 = vmatpush.msra.mxu0 %v35
  %1095 = vmatpush.msra.mxu0 %v33
  %1096 = vmatpush.msra.mxu0 %v31
  %1097 = vmatpush.msra.mxu0 %v29
  %1098 = vmatpush.msra.mxu0 %v27
  %1099 = vmatmul.f32.gmra.mxu0 %v1081
  %v1100 = vpop.f32.mrf.mxu0
  %v1101 = vadd.f32 0.0, %v1100
  %1102 = vdwg.mxu0
  %1103 = vmatpush.msra.mxu0 0.0
  %1104 = vmatpush.msra.mxu0 0.0
  %1105 = vmatpush.msra.mxu0 0.0
  %1106 = vmatpush.msra.mxu0 0.0
  %1107 = vmatpush.msra.mxu0 0.0
  %1108 = vmatpush.msra.mxu0 0.0
  %1109 = vmatpush.msra.mxu0 0.0
  %1110 = vmatpush.msra.mxu0 0.0
  %1111 = vmatpush.msra.mxu0 %v42
  %1112 = vmatpush.msra.mxu0 %v40
  %1113 = vmatpush.msra.mxu0 %v38
  %1114 = vmatpush.msra.mxu0 %v36
  %1115 = vmatpush.msra.mxu0 %v34
  %1116 = vmatpush.msra.mxu0 %v32
  %1117 = vmatpush.msra.mxu0 %v30
  %1118 = vmatpush.msra.mxu0 %v28
  %1119 = vmatmul.f32.gmra.mxu0 %v1081
  %v1120 = vpop.f32.mrf.mxu0
  %v1121 = vadd.f32 0.0, %v1120
  %1122 = vdwg.mxu0
  %v1124 = vrot.slane %v1101, 2
  %v1126 = vadd.f32 %v77, %v1124
  %v1127 = vadd.f32 %v97, %v1121
  %v1128 = vxor.u32 %v1126, 2147483648
  %v1129 = vmul.f32 %v1128, 1.442695
  %v1130 = vpow.pop %v1129
  %v1131 = vadd.f32 %v1130, 1.0
  %v1132 = vrcp.pop %v1131
  %v1133 = vmul.f32 %v1131, %v1132
  %v1134 = vsub.f32 1.0, %v1133
  %v1135 = vmul.f32 %v1132, %v1134
  %v1136 = vadd.f32 %v1132, %v1135
  %vm1137 = vweird.f32 %v1131
  %vm1138 = vweird.f32 %v1132
  %vm1139 = vmor %vm1137, %vm1138
  %v1140 = vsel %vm1139, %v1132, %v1136
  %v1141 = vand.u32 2147483647, %v1131
  %vm1142 = vcmp.eq.f32.partialorder %v1141, 8.507059e+37
  %v1143 = vand.u32 %v1131, 2147483648
  %v1144 = vor.u32 1.1754944e-38, %v1143
  %v1145 = vsel %vm1142, %v1144, %v1140
  %v1146 = vmul.f32 1.0, %v1145
  %v1147 = vtanh.pop %v1126
  %v1149 = vrot.slane %v1022, 6
  %v1151 = vmul.f32 %v1146, %v1149
  %1153 = vrot.lane.b32.xlu0 %v1147, 64
  %v1154 = vpop.permute.xlu0 %1153
  %v1156 = vmul.f32 %v1146, %v1154
  %1158 = vrot.lane.b32.xlu0 %v1156, 32
  %v1159 = vpop.permute.xlu0 %1158
  %v1161 = vadd.f32 %v1151, %v1159
  %v1162 = vtanh.pop %v1161
  %1164 = vrot.lane.b32.xlu0 %v1162, 64
  %v1165 = vpop.permute.xlu0 %1164
  %v1167 = vmul.f32 %v1146, %v1165
  %v1168 = vxor.u32 %v1127, 2147483648
  %v1169 = vmul.f32 %v1168, 1.442695
  %v1170 = vpow.pop %v1169
  %v1171 = vadd.f32 %v1170, 1.0
  %v1172 = vrcp.pop %v1171
  %v1173 = vmul.f32 %v1171, %v1172
  %v1174 = vsub.f32 1.0, %v1173
  %v1175 = vmul.f32 %v1172, %v1174
  %v1176 = vadd.f32 %v1172, %v1175
  %vm1177 = vweird.f32 %v1171
  %vm1178 = vweird.f32 %v1172
  %vm1179 = vmor %vm1177, %vm1178
  %v1180 = vsel %vm1179, %v1172, %v1176
  %v1181 = vand.u32 2147483647, %v1171
  %vm1182 = vcmp.eq.f32.partialorder %v1181, 8.507059e+37
  %v1183 = vand.u32 %v1171, 2147483648
  %v1184 = vor.u32 1.1754944e-38, %v1183
  %v1185 = vsel %vm1182, %v1184, %v1180
  %v1186 = vmul.f32 1.0, %v1185
  %v1187 = vtanh.pop %v1127
  %v1189 = vrot.slane %v1062, 2
  %v1191 = vmul.f32 %v1186, %v1189
  %1193 = vrot.lane.b32.xlu0 %v1187, 64
  %v1194 = vpop.permute.xlu0 %1193
  %v1196 = vmul.f32 %v1186, %v1194
  %1198 = vrot.lane.b32.xlu0 %v1196, 32
  %v1199 = vpop.permute.xlu0 %1198
  %v1201 = vadd.f32 %v1191, %v1199
  %v1202 = vtanh.pop %v1201
  %1204 = vrot.lane.b32.xlu0 %v1202, 64
  %v1205 = vpop.permute.xlu0 %1204
  %v1207 = vmul.f32 %v1186, %v1205
  %1209 = vrot.lane.b32.xlu0 %v1207, 64
  %v1210 = vpop.permute.xlu0 %1209
  %v1212 = vrot.slane %v325, 2
  %1213 = vrot.lane.b32.xlu0 %v1212, 96
  %v1214 = vpop.permute.xlu0 %1213
  %v1216 = vrot.slane %v1068, 2
  %v1218 = vrot.slane %v467, 4
  %1219 = vrot.lane.b32.xlu0 %v1218, 32
  %v1220 = vpop.permute.xlu0 %1219
  %v1222 = vrot.slane %v926, 4
  %1223 = vrot.lane.b32.xlu0 %v1222, 64
  %v1224 = vpop.permute.xlu0 %1223
  %v1226 = vrot.slane %v606, 6
  %1227 = vrot.lane.b32.xlu0 %v1226, 96
  %v1228 = vpop.permute.xlu0 %1227
  %1231 = vrot.lane.b32.xlu0 %v646, 64
  %v1232 = vpop.permute.xlu0 %1231
  %v1234 = vrot.slane %v886, 2
  %1235 = vrot.lane.b32.xlu0 %v1234, 96
  %v1236 = vpop.permute.xlu0 %1235
  %v1238 = vrot.slane %v507, 2
  %v1240 = vrot.slane %v1028, 4
  %1241 = vrot.lane.b32.xlu0 %v1240, 32
  %v1242 = vpop.permute.xlu0 %1241
  %v1244 = vrot.slane %v365, 4
  %1245 = vrot.lane.b32.xlu0 %v1244, 64
  %v1246 = vpop.permute.xlu0 %1245
  %v1249 = vrot.slane %v1167, 6
  %1250 = vrot.lane.b32.xlu0 %v1249, 96
  %v1251 = vpop.permute.xlu0 %1250
  %v1254 = vsel %vm49, %v227, %v1210
  %v1255 = vsel %vm102, %v1254, %v1214
  %vm1256 = vcmask 785408
  %v1257 = vsel %vm1256, %v1255, %v1216
  %v1258 = vsel %vm49, %v1220, %v1224
  %v1259 = vsel %vm102, %v1258, %v1228
  %v1260 = vsel %vm1256, %v1259, %v791
  %v1261 = vsel %vm49, %v788, %v1232
  %v1262 = vsel %vm102, %v1261, %v1236
  %v1263 = vsel %vm1256, %v1262, %v1238
  %v1264 = vsel %vm49, %v1242, %v1246
  %v1265 = vsel %vm102, %v1264, %v1251
  %v1266 = vsel %vm1256, %v1265, %v230
  %v1271 = vrot.slane %v1260, 6
  %v1272 = vrot.slane %v1263, 4
  %v1273 = vrot.slane %v1266, 2
  %vm1274 = vcmask 1041408
  %v1275 = vsel %vm1274, %v1257, %v1271
  %vm1276 = vcmask 1045508
  %v1277 = vsel %vm1276, %v1272, %v1273
  %vm1278 = vcmask 1043456
  %v1279 = vsel %vm1278, %v1275, %v1277
  %1281 = vst [vmem:[%s4] sm:$0xff] %v1279
  // Predicated region
  $region18: #{dependency_parser_forward.2} parent=0 // pred_check
    _
  $region19: #{dependency_parser_forward.2} parent=0 // pred_check_branch
    %1283 = sbr.rel (0) target = $region21
  $region20: #{dependency_parser_forward.2} parent=0 // pred_region
    _
  $region21: #{dependency_parser_forward.2} parent=0 // pred_fallthru
    _
  // Predicated region
  $region22: #{dependency_parser_forward.2} parent=0 // pred_check
    _
  $region23: #{dependency_parser_forward.2} parent=0 // pred_check_branch
    %1285 = sbr.rel (0) target = $region25
  $region24: #{dependency_parser_forward.2} parent=0 // pred_region
    _
  $region25: #{dependency_parser_forward.2} parent=0 // pred_fallthru
    _

</llo_original>
